<compile_context>
chip_gen: v5e
topology: v5e:2x2
jax: 0.10.0
libtpu: 0.0.40
codegen_flags: <defaults>
</compile_context>

<pallas_src>
import math

import jax
import jax.numpy as jnp
from jax import lax
from jax.experimental import pallas as pl
from jax.experimental.pallas import tpu as pltpu


def _gelu_tanh(v):
    # tanh-approximate GELU (same formula used in kernel and reference).
    c = math.sqrt(2.0 / math.pi)
    return 0.5 * v * (1.0 + jnp.tanh(c * (v + 0.044715 * (v * v * v))))


def _tpu_budgets():
    """Generation-aware (io_budget, vmem_limit_cap, prefer_even_grid_steps)."""
    try:
        cap = int(pltpu.get_tpu_info().vmem_capacity_bytes)
    except Exception:
        cap = 64 << 20                       # conservative (v7x-sized) fallback
    if cap >= (100 << 20):                   # v5e / v6e: 128 MiB VMEM, 1 TC
        return 24 << 20, 96 << 20, False
    return 5 << 20, 48 << 20, True           # v7x: 64 MiB VMEM, 2 TCs


def _pick_tb(batch, per_batch_io_bytes, io_budget_bytes, prefer_even_steps):
    """Largest divisor of `batch` whose per-step (in+out) block fits the budget."""
    divisors = [d for d in range(1, batch + 1) if batch % d == 0]
    fitting = [d for d in divisors if d * per_batch_io_bytes <= io_budget_bytes]
    tb = max(fitting) if fitting else 1
    if prefer_even_steps:
        # v7x: both TensorCores only get work if there are >= 2 (ideally an even
        # number of) grid steps; only split if blocks stay >= 1 MiB.
        even = [d for d in fitting
                if (batch // d) % 2 == 0 and d * per_batch_io_bytes >= (1 << 20)]
        if even:
            tb = max(even)
    return tb


def cab_forward(x, wc1, bc1, wc2, bc2, w1, b1, w2, b2):
    """Fused CAB forward.

    x:   (B, C, H, W) f32
    wc1: (Cmid, C, 3, 3), bc1: (Cmid,)   first 3x3 conv (C -> Cmid)
    wc2: (C, Cmid, 3, 3), bc2: (C,)      second 3x3 conv (Cmid -> C)
    w1:  (Mca, C), b1: (Mca,)            CA squeeze 1x1 conv
    w2:  (C, Mca), b2: (C,)              CA excite 1x1 conv
    """
    B, C, H, W = x.shape
    Cmid = wc1.shape[0]
    Mca = w1.shape[0]
    HW = H * W
    # Flat-padded spatial length: one lane-aligned pad block (>= W+1 zeros) on
    # each side, so every 3x3 tap is a static in-bounds flat slice and the
    # interior copy is an aligned full-lane store.
    P0 = ((W + 1 + 127) // 128) * 128
    PADF = P0 + HW + P0

    x_flat = x.reshape(B, C, HW).astype(jnp.float32)

    # ---- lane-dense, tap-major packed conv weights (MXU LHS) ----
    # W_packed[o, k*Cin + c] = w[o, c, dy, dx],  k = dy*3 + dx
    wc1_p = jnp.transpose(wc1, (0, 2, 3, 1)).reshape(Cmid, 9 * C).astype(jnp.float32)
    wc2_p = jnp.transpose(wc2, (0, 2, 3, 1)).reshape(C, 9 * Cmid).astype(jnp.float32)

    # CA params + conv biases packed into one small 2-D slab:
    #   cols [0:Mca]          -> w1^T        (C, Mca)
    #   cols [Mca:2Mca]       -> w2          (C, Mca)
    #   col  2Mca             -> b2          (C,)
    #   col  2Mca+1           -> conv2 bias  (C,)
    #   col  2Mca+2           -> conv1 bias  (Cmid,)
    #   row  C, cols [0:Mca]  -> b1          (Mca,)
    ncol = 2 * Mca + 3
    pp = jnp.zeros((C + 1, ncol), jnp.float32)
    pp = pp.at[0:C, 0:Mca].set(jnp.transpose(w1))
    pp = pp.at[0:C, Mca:2 * Mca].set(w2)
    pp = pp.at[0:C, 2 * Mca].set(b2)
    pp = pp.at[0:C, 2 * Mca + 1].set(bc2)
    pp = pp.at[0:Cmid, 2 * Mca + 2].set(bc1)
    pp = pp.at[C, 0:Mca].set(b1)

    # ---- generation-aware block sizing + explicit VMEM budget ----
    io_budget, vmem_cap, prefer_even = _tpu_budgets()
    per_batch_io = 2 * C * HW * 4                    # x block + out block, f32
    TB = _pick_tb(B, per_batch_io, io_budget, prefer_even)

    param_bytes = 4 * (Cmid * 9 * C + C * 9 * Cmid + (C + 1) * ncol)
    scratch_bytes = 4 * ((C + Cmid) * PADF + 9 * C * HW)
    vmem_limit = int(min(vmem_cap,
                         max(32 << 20,
                             2 * TB * per_batch_io      # double-buffered in+out
                             + 2 * param_bytes
                             + scratch_bytes
                             + (4 << 20))))

    inv_hw = 1.0 / float(HW)     # true H*W (no padded zeros enter the mean)

    def kernel(x_ref, wc1_ref, wc2_ref, pp_ref, o_ref,
               xpad_ref, gpad_ref, im_ref):
        # Row-boundary masks generated in-kernel (no operand DMA), hoisted out
        # of the batch loop: row 0-mask kills w==0 for dx==0 taps, the other
        # kills w==W-1 for dx==2 taps.
        col = lax.broadcasted_iota(jnp.int32, (1, HW), 1) % W
        mask_l = (col != 0).astype(jnp.float32)
        mask_r = (col != W - 1).astype(jnp.float32)

        # Zero ONLY the halo columns, once per grid step (interiors are fully
        # rewritten per batch element). Scratch is per-core under "parallel"
        # semantics, so this must NOT be gated on program_id == 0.
        xpad_ref[:, 0:P0] = jnp.zeros((C, P0), jnp.float32)
        xpad_ref[:, P0 + HW:PADF] = jnp.zeros((C, P0), jnp.float32)
        gpad_ref[:, 0:P0] = jnp.zeros((Cmid, P0), jnp.float32)
        gpad_ref[:, P0 + HW:PADF] = jnp.zeros((Cmid, P0), jnp.float32)

        w1t = pp_ref[0:C, 0:Mca]                        # (C, Mca)
        w2m = pp_ref[0:C, Mca:2 * Mca]                  # (C, Mca)
        b2v = pp_ref[0:C, 2 * Mca:2 * Mca + 1]          # (C, 1)
        bc2v = pp_ref[0:C, 2 * Mca + 1:2 * Mca + 2]     # (C, 1)
        bc1v = pp_ref[0:Cmid, 2 * Mca + 2:2 * Mca + 3]  # (Cmid, 1)
        b1v = pp_ref[C:C + 1, 0:Mca]                    # (1, Mca)

        def stage_im2col(src_ref, cin):
            # src_ref: (cin, PADF) zero-halo padded image.  Writes rows
            # [k*cin:(k+1)*cin) of im_ref with the masked shifted view of tap
            # k = dy*3 + dx (static flat slices -> no gathers).
            for k in range(9):
                dy, dx = divmod(k, 3)
                s = P0 - (W + 1) + dy * W + dx          # static start
                sl = src_ref[:, s:s + HW]               # (cin, HW)
                if dx == 0:
                    sl = sl * mask_l
                elif dx == 2:
                    sl = sl * mask_r
                im_ref[k * cin:(k + 1) * cin, :] = sl

        def batch_body(b, carry):
            # Stage input into the padded flat image (aligned full-tile store).
            xpad_ref[:, P0:P0 + HW] = x_ref[b]

            # ---- conv1 (3x3, C -> Cmid): im2col + one MXU matmul, then GELU ----
            stage_im2col(xpad_ref, C)
            h = jnp.dot(wc1_ref[...], im_ref[...],
                        preferred_element_type=jnp.float32) + bc1v      # (Cmid, HW)
            gpad_ref[:, P0:P0 + HW] = _gelu_tanh(h)

            # ---- conv2 (3x3, Cmid -> C): im2col + one MXU matmul ----
            stage_im2col(gpad_ref, Cmid)
            y = jnp.dot(wc2_ref[...], im_ref[0:9 * Cmid, :],
                        preferred_element_type=jnp.float32) + bc2v      # (C, HW)

            # ---- RCAN channel attention (tiny -> VPU/XLU) ----
            pooled = jnp.sum(y, axis=1, keepdims=True) * inv_hw         # (C, 1)
            hca = jnp.maximum(
                jnp.sum(w1t * pooled, axis=0, keepdims=True) + b1v, 0.0)  # (1, Mca)
            s_att = jax.nn.sigmoid(
                jnp.sum(w2m * hca, axis=1, keepdims=True) + b2v)          # (C, 1)

            # Single full-tile scaled store of the output block row.
            o_ref[b] = (y * s_att).astype(o_ref.dtype)
            return carry

        lax.fori_loop(0, TB, batch_body, 0)

    cost = pl.CostEstimate(
        flops=4 * B * HW * 9 * C * Cmid,                  # two 3x3 convs (MACs*2)
        transcendentals=B * (Cmid * HW + C),              # GELU tanh + sigmoid
        bytes_accessed=4 * (2 * B * C * HW
                            + Cmid * 9 * C + C * 9 * Cmid + (C + 1) * ncol),
    )

    out_flat = pl.pallas_call(
        kernel,
        out_shape=jax.ShapeDtypeStruct((B, C, HW), jnp.float32),
        grid_spec=pltpu.PrefetchScalarGridSpec(
            num_scalar_prefetch=0,
            grid=(B // TB,),
            in_specs=[
                pl.BlockSpec((TB, C, HW), lambda i: (i, 0, 0)),
                pl.BlockSpec((Cmid, 9 * C), lambda i: (0, 0)),
                pl.BlockSpec((C, 9 * Cmid), lambda i: (0, 0)),
                pl.BlockSpec((C + 1, ncol), lambda i: (0, 0)),
            ],
            out_specs=pl.BlockSpec((TB, C, HW), lambda i: (i, 0, 0)),
            scratch_shapes=[
                pltpu.VMEM((C, PADF), jnp.float32),       # padded input image
                pltpu.VMEM((Cmid, PADF), jnp.float32),    # padded GELU(conv1)
                pltpu.VMEM((9 * C, HW), jnp.float32),     # im2col slab (shared)
            ],
        ),
        compiler_params=pltpu.CompilerParams(
            dimension_semantics=("parallel",),
            vmem_limit_bytes=vmem_limit),
        cost_estimate=cost,
    )(x_flat, wc1_p, wc2_p, pp)

    return out_flat.reshape(B, C, H, W).astype(x.dtype)


def cab_ref(x, wc1, bc1, wc2, bc2, w1, b1, w2, b2):
    """Plain-JAX reference mirroring the PyTorch CAB module (HIGHEST precision)."""
    dn = ('NCHW', 'OIHW', 'NCHW')
    hp = jax.lax.Precision.HIGHEST
    f = jax.lax.conv_general_dilated(x, wc1, (1, 1), 'SAME',
                                     dimension_numbers=dn, precision=hp)
    f = f + bc1[None, :, None, None]
    f = _gelu_tanh(f)
    f = jax.lax.conv_general_dilated(f, wc2, (1, 1), 'SAME',
                                     dimension_numbers=dn, precision=hp)
    f = f + bc2[None, :, None, None]
    pooled = jnp.mean(f, axis=(2, 3))                           # (B, C)
    h = jnp.maximum(pooled @ w1.T + b1, 0.0)                    # (B, Mca)
    s = jax.nn.sigmoid(h @ w2.T + b2)                           # (B, C)
    return f * s[:, :, None, None]


if __name__ == "__main__":
    # num_feat must be >= squeeze_factor(12); 12 gives Cmid=12//3=4, Mca=12//12=1.
    B, C, H, W = 2, 12, 16, 16
    COMPRESS, SQUEEZE = 3, 12
    Cmid, Mca = C // COMPRESS, C // SQUEEZE

    key = jax.random.PRNGKey(0)
    ks = jax.random.split(key, 9)
    x   = jax.random.normal(ks[0], (B, C, H, W), dtype=jnp.float32)
    wc1 = 0.15 * jax.random.normal(ks[1], (Cmid, C, 3, 3), dtype=jnp.float32)
    bc1 = 0.10 * jax.random.normal(ks[2], (Cmid,), dtype=jnp.float32)
    wc2 = 0.15 * jax.random.normal(ks[3], (C, Cmid, 3, 3), dtype=jnp.float32)
    bc2 = 0.10 * jax.random.normal(ks[4], (C,), dtype=jnp.float32)
    w1  = 0.20 * jax.random.normal(ks[5], (Mca, C), dtype=jnp.float32)
    b1  = 0.10 * jax.random.normal(ks[6], (Mca,), dtype=jnp.float32)
    w2  = 0.20 * jax.random.normal(ks[7], (C, Mca), dtype=jnp.float32)
    b2  = 0.10 * jax.random.normal(ks[8], (C,), dtype=jnp.float32)

    out = cab_forward(x, wc1, bc1, wc2, bc2, w1, b1, w2, b2)
    out = jax.block_until_ready(out)

    ref = cab_ref(x, wc1, bc1, wc2, bc2, w1, b1, w2, b2)
    assert out.shape == (B, C, H, W)
    # Tolerance accommodates possible reduced-precision MXU passes for the f32
    # matmuls (generation/compiler dependent) on top of the tanh-GELU approx.
    err = float(jnp.max(jnp.abs(out - ref)))
    assert jnp.allclose(out, ref, atol=2e-2, rtol=2e-2), \
        "mismatch vs reference (max abs err %e)" % err

    print("KERNEL_OK")
</pallas_src>

<mosaic_0001>
module attributes {stable_mosaic.version = 11 : i64} {
  func.func @kernel(%arg0: i32, %arg1: memref<2x12x256xf32, #tpu.memory_space<vmem>>, %arg2: memref<4x108xf32, #tpu.memory_space<vmem>>, %arg3: memref<12x36xf32, #tpu.memory_space<vmem>>, %arg4: memref<13x5xf32, #tpu.memory_space<vmem>>, %arg5: memref<2x12x256xf32, #tpu.memory_space<vmem>>, %arg6: memref<12x512xf32, #tpu.memory_space<vmem>>, %arg7: memref<4x512xf32, #tpu.memory_space<vmem>>, %arg8: memref<108x256xf32, #tpu.memory_space<vmem>>) attributes {dimension_semantics = [#tpu.dimension_semantics<parallel>], iteration_bounds = array<i64: 1>, scalar_prefetch = 0 : i64, scratch_operands = 3 : i64, tpu.core_type = #tpu.core_type<tc>, window_params = [{transform_indices = @transform_0, window_bounds = array<i64: 2, 12, 256>}, {pipeline_mode = #tpu.pipeline_mode<synchronous>, transform_indices = @transform_1, window_bounds = array<i64: 4, 108>}, {pipeline_mode = #tpu.pipeline_mode<synchronous>, transform_indices = @transform_2, window_bounds = array<i64: 12, 36>}, {pipeline_mode = #tpu.pipeline_mode<synchronous>, transform_indices = @transform_3, window_bounds = array<i64: 13, 5>}, {transform_indices = @transform_4, window_bounds = array<i64: 2, 12, 256>}]} {
    %0 = tpu.iota {dimensions = array<i32: 1>} : vector<1x256xi32>
    %c16_i32 = arith.constant 16 : i32
    %c0_i32 = arith.constant 0 : i32
    %1 = arith.cmpi eq, %c16_i32, %c0_i32 : i32
    %c1_i32 = arith.constant 1 : i32
    %2 = arith.select %1, %c1_i32, %c16_i32 : i32
    %3 = vector.broadcast %2 : i32 to vector<1x256xi32>
    %4 = arith.remsi %0, %3 : vector<1x256xi32>
    %c0_i32_0 = arith.constant 0 : i32
    %5 = vector.broadcast %c0_i32_0 : i32 to vector<1x256xi32>
    %6 = arith.cmpi ne, %4, %5 : vector<1x256xi32>
    %c0_i32_1 = arith.constant 0 : i32
    %7 = vector.broadcast %c0_i32_1 : i32 to vector<1x256xi32>
    %8 = arith.cmpi slt, %4, %7 : vector<1x256xi32>
    %c0_i32_2 = arith.constant 0 : i32
    %9 = arith.cmpi slt, %2, %c0_i32_2 : i32
    %10 = vector.broadcast %9 : i1 to vector<1x256xi1>
    %11 = vector.broadcast %10 : vector<1x256xi1> to vector<1x256xi1>
    %12 = arith.xori %8, %11 : vector<1x256xi1>
    %13 = arith.andi %12, %6 : vector<1x256xi1>
    %14 = vector.broadcast %2 : i32 to vector<1x256xi32>
    %15 = arith.addi %4, %14 : vector<1x256xi32>
    %16 = arith.select %13, %15, %4 : vector<1x256xi1>, vector<1x256xi32>
    %c0_i32_3 = arith.constant 0 : i32
    %17 = vector.broadcast %c0_i32_3 : i32 to vector<1x256xi32>
    %18 = arith.cmpi ne, %16, %17 : vector<1x256xi32>
    %19 = arith.extui %18 : vector<1x256xi1> to vector<1x256xi32>
    %20 = arith.sitofp %19 : vector<1x256xi32> to vector<1x256xf32>
    %c15_i32 = arith.constant 15 : i32
    %21 = vector.broadcast %c15_i32 : i32 to vector<1x256xi32>
    %22 = arith.cmpi ne, %16, %21 : vector<1x256xi32>
    %23 = arith.extui %22 : vector<1x256xi1> to vector<1x256xi32>
    %24 = arith.sitofp %23 : vector<1x256xi32> to vector<1x256xf32>
    %cst = arith.constant 0.000000e+00 : f32
    %25 = vector.broadcast %cst : f32 to vector<12x128xf32>
    %c0 = arith.constant 0 : index
    %c0_4 = arith.constant 0 : index
    %26 = vector.load %arg6[%c0, %c0_4] : memref<12x512xf32, #tpu.memory_space<vmem>>, vector<12x128xf32>
    tpu.vector_store %arg6[%c0, %c0_4], %25 {strides = array<i32>} : memref<12x512xf32, #tpu.memory_space<vmem>>, vector<12x128xf32>,
    %cst_5 = arith.constant 0.000000e+00 : f32
    %27 = vector.broadcast %cst_5 : f32 to vector<12x128xf32>
    %c0_6 = arith.constant 0 : index
    %c384 = arith.constant 384 : index
    %28 = vector.load %arg6[%c0_6, %c384] : memref<12x512xf32, #tpu.memory_space<vmem>>, vector<12x128xf32>
    tpu.vector_store %arg6[%c0_6, %c384], %27 {strides = array<i32>} : memref<12x512xf32, #tpu.memory_space<vmem>>, vector<12x128xf32>,
    %cst_7 = arith.constant 0.000000e+00 : f32
    %29 = vector.broadcast %cst_7 : f32 to vector<4x128xf32>
    %c0_8 = arith.constant 0 : index
    %c0_9 = arith.constant 0 : index
    %30 = vector.load %arg7[%c0_8, %c0_9] : memref<4x512xf32, #tpu.memory_space<vmem>>, vector<4x128xf32>
    tpu.vector_store %arg7[%c0_8, %c0_9], %29 {strides = array<i32>} : memref<4x512xf32, #tpu.memory_space<vmem>>, vector<4x128xf32>,
    %cst_10 = arith.constant 0.000000e+00 : f32
    %31 = vector.broadcast %cst_10 : f32 to vector<4x128xf32>
    %c0_11 = arith.constant 0 : index
    %c384_12 = arith.constant 384 : index
    %32 = vector.load %arg7[%c0_11, %c384_12] : memref<4x512xf32, #tpu.memory_space<vmem>>, vector<4x128xf32>
    tpu.vector_store %arg7[%c0_11, %c384_12], %31 {strides = array<i32>} : memref<4x512xf32, #tpu.memory_space<vmem>>, vector<4x128xf32>,
    %c0_13 = arith.constant 0 : index
    %c0_14 = arith.constant 0 : index
    %33 = vector.load %arg4[%c0_13, %c0_14] : memref<13x5xf32, #tpu.memory_space<vmem>>, vector<12x1xf32>
    %c0_15 = arith.constant 0 : index
    %c1 = arith.constant 1 : index
    %34 = vector.load %arg4[%c0_15, %c1] : memref<13x5xf32, #tpu.memory_space<vmem>>, vector<12x1xf32>
    %c0_16 = arith.constant 0 : index
    %c2 = arith.constant 2 : index
    %35 = vector.load %arg4[%c0_16, %c2] : memref<13x5xf32, #tpu.memory_space<vmem>>, vector<12x1xf32>
    %c0_17 = arith.constant 0 : index
    %c3 = arith.constant 3 : index
    %36 = vector.load %arg4[%c0_17, %c3] : memref<13x5xf32, #tpu.memory_space<vmem>>, vector<12x1xf32>
    %c0_18 = arith.constant 0 : index
    %c4 = arith.constant 4 : index
    %37 = vector.load %arg4[%c0_18, %c4] : memref<13x5xf32, #tpu.memory_space<vmem>>, vector<4x1xf32>
    %c12 = arith.constant 12 : index
    %c0_19 = arith.constant 0 : index
    %38 = vector.load %arg4[%c12, %c0_19] : memref<13x5xf32, #tpu.memory_space<vmem>>, vector<1x1xf32>
    %c0_i32_20 = arith.constant 0 : i32
    %c2_i32 = arith.constant 2 : i32
    %39 = arith.addi %c0_i32_20, %c2_i32 : i32
    %c1_i32_21 = arith.constant 1 : i32
    scf.for %arg9 = %c0_i32_20 to %39 step %c1_i32_21  : i32 {
      %40 = arith.index_cast %arg9 : i32 to index
      %c0_23 = arith.constant 0 : index
      %c0_24 = arith.constant 0 : index
      %41 = vector.load %arg1[%40, %c0_23, %c0_24] : memref<2x12x256xf32, #tpu.memory_space<vmem>>, vector<1x12x256xf32>
      %42 = vector.shape_cast %41 : vector<1x12x256xf32> to vector<12x256xf32>
      %c0_25 = arith.constant 0 : index
      %c128 = arith.constant 128 : index
      %43 = vector.load %arg6[%c0_25, %c128] : memref<12x512xf32, #tpu.memory_space<vmem>>, vector<12x256xf32>
      tpu.vector_store %arg6[%c0_25, %c128], %42 {strides = array<i32>} : memref<12x512xf32, #tpu.memory_space<vmem>>, vector<12x256xf32>,
      %c0_26 = arith.constant 0 : index
      %c111 = arith.constant 111 : index
      %44 = vector.load %arg6[%c0_26, %c111] : memref<12x512xf32, #tpu.memory_space<vmem>>, vector<12x256xf32>
      %45 = vector.broadcast %20 : vector<1x256xf32> to vector<12x256xf32>
      %46 = arith.mulf %44, %45 : vector<12x256xf32>
      %c0_27 = arith.constant 0 : index
      %c0_28 = arith.constant 0 : index
      %47 = vector.load %arg8[%c0_27, %c0_28] : memref<108x256xf32, #tpu.memory_space<vmem>>, vector<12x256xf32>
      tpu.vector_store %arg8[%c0_27, %c0_28], %46 {strides = array<i32>} : memref<108x256xf32, #tpu.memory_space<vmem>>, vector<12x256xf32>,
      %c0_29 = arith.constant 0 : index
      %c112 = arith.constant 112 : index
      %48 = vector.load %arg6[%c0_29, %c112] : memref<12x512xf32, #tpu.memory_space<vmem>>, vector<12x256xf32>
      %c12_30 = arith.constant 12 : index
      %c0_31 = arith.constant 0 : index
      %49 = vector.load %arg8[%c12_30, %c0_31] : memref<108x256xf32, #tpu.memory_space<vmem>>, vector<12x256xf32>
      tpu.vector_store %arg8[%c12_30, %c0_31], %48 {strides = array<i32>} : memref<108x256xf32, #tpu.memory_space<vmem>>, vector<12x256xf32>,
      %c0_32 = arith.constant 0 : index
      %c113 = arith.constant 113 : index
      %50 = vector.load %arg6[%c0_32, %c113] : memref<12x512xf32, #tpu.memory_space<vmem>>, vector<12x256xf32>
      %51 = vector.broadcast %24 : vector<1x256xf32> to vector<12x256xf32>
      %52 = arith.mulf %50, %51 : vector<12x256xf32>
      %c24 = arith.constant 24 : index
      %c0_33 = arith.constant 0 : index
      %53 = vector.load %arg8[%c24, %c0_33] : memref<108x256xf32, #tpu.memory_space<vmem>>, vector<12x256xf32>
      tpu.vector_store %arg8[%c24, %c0_33], %52 {strides = array<i32>} : memref<108x256xf32, #tpu.memory_space<vmem>>, vector<12x256xf32>,
      %c0_34 = arith.constant 0 : index
      %c127 = arith.constant 127 : index
      %54 = vector.load %arg6[%c0_34, %c127] : memref<12x512xf32, #tpu.memory_space<vmem>>, vector<12x256xf32>
      %55 = vector.broadcast %20 : vector<1x256xf32> to vector<12x256xf32>
      %56 = arith.mulf %54, %55 : vector<12x256xf32>
      %c36 = arith.constant 36 : index
      %c0_35 = arith.constant 0 : index
      %57 = vector.load %arg8[%c36, %c0_35] : memref<108x256xf32, #tpu.memory_space<vmem>>, vector<12x256xf32>
      tpu.vector_store %arg8[%c36, %c0_35], %56 {strides = array<i32>} : memref<108x256xf32, #tpu.memory_space<vmem>>, vector<12x256xf32>,
      %c0_36 = arith.constant 0 : index
      %c128_37 = arith.constant 128 : index
      %58 = vector.load %arg6[%c0_36, %c128_37] : memref<12x512xf32, #tpu.memory_space<vmem>>, vector<12x256xf32>
      %c48 = arith.constant 48 : index
      %c0_38 = arith.constant 0 : index
      %59 = vector.load %arg8[%c48, %c0_38] : memref<108x256xf32, #tpu.memory_space<vmem>>, vector<12x256xf32>
      tpu.vector_store %arg8[%c48, %c0_38], %58 {strides = array<i32>} : memref<108x256xf32, #tpu.memory_space<vmem>>, vector<12x256xf32>,
      %c0_39 = arith.constant 0 : index
      %c129 = arith.constant 129 : index
      %60 = vector.load %arg6[%c0_39, %c129] : memref<12x512xf32, #tpu.memory_space<vmem>>, vector<12x256xf32>
      %61 = vector.broadcast %24 : vector<1x256xf32> to vector<12x256xf32>
      %62 = arith.mulf %60, %61 : vector<12x256xf32>
      %c60 = arith.constant 60 : index
      %c0_40 = arith.constant 0 : index
      %63 = vector.load %arg8[%c60, %c0_40] : memref<108x256xf32, #tpu.memory_space<vmem>>, vector<12x256xf32>
      tpu.vector_store %arg8[%c60, %c0_40], %62 {strides = array<i32>} : memref<108x256xf32, #tpu.memory_space<vmem>>, vector<12x256xf32>,
      %c0_41 = arith.constant 0 : index
      %c143 = arith.constant 143 : index
      %64 = vector.load %arg6[%c0_41, %c143] : memref<12x512xf32, #tpu.memory_space<vmem>>, vector<12x256xf32>
      %65 = vector.broadcast %20 : vector<1x256xf32> to vector<12x256xf32>
      %66 = arith.mulf %64, %65 : vector<12x256xf32>
      %c72 = arith.constant 72 : index
      %c0_42 = arith.constant 0 : index
      %67 = vector.load %arg8[%c72, %c0_42] : memref<108x256xf32, #tpu.memory_space<vmem>>, vector<12x256xf32>
      tpu.vector_store %arg8[%c72, %c0_42], %66 {strides = array<i32>} : memref<108x256xf32, #tpu.memory_space<vmem>>, vector<12x256xf32>,
      %c0_43 = arith.constant 0 : index
      %c144 = arith.constant 144 : index
      %68 = vector.load %arg6[%c0_43, %c144] : memref<12x512xf32, #tpu.memory_space<vmem>>, vector<12x256xf32>
      %c84 = arith.constant 84 : index
      %c0_44 = arith.constant 0 : index
      %69 = vector.load %arg8[%c84, %c0_44] : memref<108x256xf32, #tpu.memory_space<vmem>>, vector<12x256xf32>
      tpu.vector_store %arg8[%c84, %c0_44], %68 {strides = array<i32>} : memref<108x256xf32, #tpu.memory_space<vmem>>, vector<12x256xf32>,
      %c0_45 = arith.constant 0 : index
      %c145 = arith.constant 145 : index
      %70 = vector.load %arg6[%c0_45, %c145] : memref<12x512xf32, #tpu.memory_space<vmem>>, vector<12x256xf32>
      %71 = vector.broadcast %24 : vector<1x256xf32> to vector<12x256xf32>
      %72 = arith.mulf %70, %71 : vector<12x256xf32>
      %c96 = arith.constant 96 : index
      %c0_46 = arith.constant 0 : index
      %73 = vector.load %arg8[%c96, %c0_46] : memref<108x256xf32, #tpu.memory_space<vmem>>, vector<12x256xf32>
      tpu.vector_store %arg8[%c96, %c0_46], %72 {strides = array<i32>} : memref<108x256xf32, #tpu.memory_space<vmem>>, vector<12x256xf32>,
      %c0_47 = arith.constant 0 : index
      %c0_48 = arith.constant 0 : index
      %74 = vector.load %arg2[%c0_47, %c0_48] : memref<4x108xf32, #tpu.memory_space<vmem>>, vector<4x108xf32>
      %c0_49 = arith.constant 0 : index
      %c0_50 = arith.constant 0 : index
      %75 = vector.load %arg8[%c0_49, %c0_50] : memref<108x256xf32, #tpu.memory_space<vmem>>, vector<108x256xf32>
      %cst_51 = arith.constant dense<0.000000e+00> : vector<4x256xf32>
      %76 = tpu.matmul %74, %75, %cst_51 {dimension_numbers = #tpu.dot_dimension_numbers<[1], [0], [0], [1], [0, 0, 1, 1], [], []>} : vector<4x108xf32>, vector<108x256xf32>, vector<4x256xf32> -> vector<4x256xf32>
      %77 = vector.broadcast %37 : vector<4x1xf32> to vector<4x256xf32>
      %78 = arith.addf %76, %77 : vector<4x256xf32>
      %cst_52 = arith.constant 5.000000e-01 : f32
      %79 = vector.broadcast %cst_52 : f32 to vector<4x256xf32>
      %80 = arith.mulf %79, %78 : vector<4x256xf32>
      %81 = arith.mulf %78, %78 : vector<4x256xf32>
      %82 = arith.mulf %81, %78 : vector<4x256xf32>
      %cst_53 = arith.constant 4.471500e-02 : f32
      %83 = vector.broadcast %cst_53 : f32 to vector<4x256xf32>
      %84 = arith.mulf %83, %82 : vector<4x256xf32>
      %85 = arith.addf %78, %84 : vector<4x256xf32>
      %cst_54 = arith.constant 0.797884583 : f32
      %86 = vector.broadcast %cst_54 : f32 to vector<4x256xf32>
      %87 = arith.mulf %86, %85 : vector<4x256xf32>
      %88 = math.tanh %87 : vector<4x256xf32>
      %cst_55 = arith.constant 1.000000e+00 : f32
      %89 = vector.broadcast %cst_55 : f32 to vector<4x256xf32>
      %90 = arith.addf %89, %88 : vector<4x256xf32>
      %91 = arith.mulf %80, %90 : vector<4x256xf32>
      %c0_56 = arith.constant 0 : index
      %c128_57 = arith.constant 128 : index
      %92 = vector.load %arg7[%c0_56, %c128_57] : memref<4x512xf32, #tpu.memory_space<vmem>>, vector<4x256xf32>
      tpu.vector_store %arg7[%c0_56, %c128_57], %91 {strides = array<i32>} : memref<4x512xf32, #tpu.memory_space<vmem>>, vector<4x256xf32>,
      %c0_58 = arith.constant 0 : index
      %c111_59 = arith.constant 111 : index
      %93 = vector.load %arg7[%c0_58, %c111_59] : memref<4x512xf32, #tpu.memory_space<vmem>>, vector<4x256xf32>
      %94 = vector.broadcast %20 : vector<1x256xf32> to vector<4x256xf32>
      %95 = arith.mulf %93, %94 : vector<4x256xf32>
      %c0_60 = arith.constant 0 : index
      %c0_61 = arith.constant 0 : index
      %96 = vector.load %arg8[%c0_60, %c0_61] : memref<108x256xf32, #tpu.memory_space<vmem>>, vector<4x256xf32>
      tpu.vector_store %arg8[%c0_60, %c0_61], %95 {strides = array<i32>} : memref<108x256xf32, #tpu.memory_space<vmem>>, vector<4x256xf32>,
      %c0_62 = arith.constant 0 : index
      %c112_63 = arith.constant 112 : index
      %97 = vector.load %arg7[%c0_62, %c112_63] : memref<4x512xf32, #tpu.memory_space<vmem>>, vector<4x256xf32>
      %c4_64 = arith.constant 4 : index
      %c0_65 = arith.constant 0 : index
      %98 = vector.load %arg8[%c4_64, %c0_65] : memref<108x256xf32, #tpu.memory_space<vmem>>, vector<4x256xf32>
      tpu.vector_store %arg8[%c4_64, %c0_65], %97 {strides = array<i32>} : memref<108x256xf32, #tpu.memory_space<vmem>>, vector<4x256xf32>,
      %c0_66 = arith.constant 0 : index
      %c113_67 = arith.constant 113 : index
      %99 = vector.load %arg7[%c0_66, %c113_67] : memref<4x512xf32, #tpu.memory_space<vmem>>, vector<4x256xf32>
      %100 = vector.broadcast %24 : vector<1x256xf32> to vector<4x256xf32>
      %101 = arith.mulf %99, %100 : vector<4x256xf32>
      %c8 = arith.constant 8 : index
      %c0_68 = arith.constant 0 : index
      %102 = vector.load %arg8[%c8, %c0_68] : memref<108x256xf32, #tpu.memory_space<vmem>>, vector<4x256xf32>
      tpu.vector_store %arg8[%c8, %c0_68], %101 {strides = array<i32>} : memref<108x256xf32, #tpu.memory_space<vmem>>, vector<4x256xf32>,
      %c0_69 = arith.constant 0 : index
      %c127_70 = arith.constant 127 : index
      %103 = vector.load %arg7[%c0_69, %c127_70] : memref<4x512xf32, #tpu.memory_space<vmem>>, vector<4x256xf32>
      %104 = vector.broadcast %20 : vector<1x256xf32> to vector<4x256xf32>
      %105 = arith.mulf %103, %104 : vector<4x256xf32>
      %c12_71 = arith.constant 12 : index
      %c0_72 = arith.constant 0 : index
      %106 = vector.load %arg8[%c12_71, %c0_72] : memref<108x256xf32, #tpu.memory_space<vmem>>, vector<4x256xf32>
      tpu.vector_store %arg8[%c12_71, %c0_72], %105 {strides = array<i32>} : memref<108x256xf32, #tpu.memory_space<vmem>>, vector<4x256xf32>,
      %c0_73 = arith.constant 0 : index
      %c128_74 = arith.constant 128 : index
      %107 = vector.load %arg7[%c0_73, %c128_74] : memref<4x512xf32, #tpu.memory_space<vmem>>, vector<4x256xf32>
      %c16 = arith.constant 16 : index
      %c0_75 = arith.constant 0 : index
      %108 = vector.load %arg8[%c16, %c0_75] : memref<108x256xf32, #tpu.memory_space<vmem>>, vector<4x256xf32>
      tpu.vector_store %arg8[%c16, %c0_75], %107 {strides = array<i32>} : memref<108x256xf32, #tpu.memory_space<vmem>>, vector<4x256xf32>,
      %c0_76 = arith.constant 0 : index
      %c129_77 = arith.constant 129 : index
      %109 = vector.load %arg7[%c0_76, %c129_77] : memref<4x512xf32, #tpu.memory_space<vmem>>, vector<4x256xf32>
      %110 = vector.broadcast %24 : vector<1x256xf32> to vector<4x256xf32>
      %111 = arith.mulf %109, %110 : vector<4x256xf32>
      %c20 = arith.constant 20 : index
      %c0_78 = arith.constant 0 : index
      %112 = vector.load %arg8[%c20, %c0_78] : memref<108x256xf32, #tpu.memory_space<vmem>>, vector<4x256xf32>
      tpu.vector_store %arg8[%c20, %c0_78], %111 {strides = array<i32>} : memref<108x256xf32, #tpu.memory_space<vmem>>, vector<4x256xf32>,
      %c0_79 = arith.constant 0 : index
      %c143_80 = arith.constant 143 : index
      %113 = vector.load %arg7[%c0_79, %c143_80] : memref<4x512xf32, #tpu.memory_space<vmem>>, vector<4x256xf32>
      %114 = vector.broadcast %20 : vector<1x256xf32> to vector<4x256xf32>
      %115 = arith.mulf %113, %114 : vector<4x256xf32>
      %c24_81 = arith.constant 24 : index
      %c0_82 = arith.constant 0 : index
      %116 = vector.load %arg8[%c24_81, %c0_82] : memref<108x256xf32, #tpu.memory_space<vmem>>, vector<4x256xf32>
      tpu.vector_store %arg8[%c24_81, %c0_82], %115 {strides = array<i32>} : memref<108x256xf32, #tpu.memory_space<vmem>>, vector<4x256xf32>,
      %c0_83 = arith.constant 0 : index
      %c144_84 = arith.constant 144 : index
      %117 = vector.load %arg7[%c0_83, %c144_84] : memref<4x512xf32, #tpu.memory_space<vmem>>, vector<4x256xf32>
      %c28 = arith.constant 28 : index
      %c0_85 = arith.constant 0 : index
      %118 = vector.load %arg8[%c28, %c0_85] : memref<108x256xf32, #tpu.memory_space<vmem>>, vector<4x256xf32>
      tpu.vector_store %arg8[%c28, %c0_85], %117 {strides = array<i32>} : memref<108x256xf32, #tpu.memory_space<vmem>>, vector<4x256xf32>,
      %c0_86 = arith.constant 0 : index
      %c145_87 = arith.constant 145 : index
      %119 = vector.load %arg7[%c0_86, %c145_87] : memref<4x512xf32, #tpu.memory_space<vmem>>, vector<4x256xf32>
      %120 = vector.broadcast %24 : vector<1x256xf32> to vector<4x256xf32>
      %121 = arith.mulf %119, %120 : vector<4x256xf32>
      %c32 = arith.constant 32 : index
      %c0_88 = arith.constant 0 : index
      %122 = vector.load %arg8[%c32, %c0_88] : memref<108x256xf32, #tpu.memory_space<vmem>>, vector<4x256xf32>
      tpu.vector_store %arg8[%c32, %c0_88], %121 {strides = array<i32>} : memref<108x256xf32, #tpu.memory_space<vmem>>, vector<4x256xf32>,
      %c0_89 = arith.constant 0 : index
      %c0_90 = arith.constant 0 : index
      %123 = vector.load %arg3[%c0_89, %c0_90] : memref<12x36xf32, #tpu.memory_space<vmem>>, vector<12x36xf32>
      %c0_91 = arith.constant 0 : index
      %c0_92 = arith.constant 0 : index
      %124 = vector.load %arg8[%c0_91, %c0_92] : memref<108x256xf32, #tpu.memory_space<vmem>>, vector<36x256xf32>
      %cst_93 = arith.constant dense<0.000000e+00> : vector<12x256xf32>
      %125 = tpu.matmul %123, %124, %cst_93 {dimension_numbers = #tpu.dot_dimension_numbers<[1], [0], [0], [1], [0, 0, 1, 1], [], []>} : vector<12x36xf32>, vector<36x256xf32>, vector<12x256xf32> -> vector<12x256xf32>
      %126 = vector.broadcast %36 : vector<12x1xf32> to vector<12x256xf32>
      %127 = arith.addf %125, %126 : vector<12x256xf32>
      %cst_94 = arith.constant dense<0.000000e+00> : vector<12xf32>
      %128 = vector.multi_reduction <add>, %127, %cst_94 [1] : vector<12x256xf32> to vector<12xf32>
      %129 = vector.shape_cast %128 : vector<12xf32> to vector<12x1xf32>
      %cst_95 = arith.constant 3.906250e-03 : f32
      %130 = vector.broadcast %cst_95 : f32 to vector<12x1xf32>
      %131 = arith.mulf %129, %130 : vector<12x1xf32>
      %132 = arith.mulf %33, %131 : vector<12x1xf32>
      %cst_96 = arith.constant dense<0.000000e+00> : vector<1xf32>
      %133 = vector.multi_reduction <add>, %132, %cst_96 [0] : vector<12x1xf32> to vector<1xf32>
      %134 = vector.shape_cast %133 : vector<1xf32> to vector<1x1xf32>
      %135 = arith.addf %134, %38 : vector<1x1xf32>
      %cst_97 = arith.constant 0.000000e+00 : f32
      %136 = vector.broadcast %cst_97 : f32 to vector<1x1xf32>
      %137 = arith.maximumf %135, %136 : vector<1x1xf32>
      %138 = vector.broadcast %137 : vector<1x1xf32> to vector<12x1xf32>
      %139 = arith.mulf %34, %138 : vector<12x1xf32>
      %cst_98 = arith.constant dense<0.000000e+00> : vector<12xf32>
      %140 = vector.multi_reduction <add>, %139, %cst_98 [1] : vector<12x1xf32> to vector<12xf32>
      %141 = vector.shape_cast %140 : vector<12xf32> to vector<12x1xf32>
      %142 = arith.addf %141, %35 : vector<12x1xf32>
      %143 = arith.negf %142 : vector<12x1xf32>
      %144 = math.exp %143 : vector<12x1xf32>
      %cst_99 = arith.constant 1.000000e+00 : f32
      %145 = vector.broadcast %cst_99 : f32 to vector<12x1xf32>
      %146 = arith.addf %145, %144 : vector<12x1xf32>
      %147 = arith.divf %145, %146 : vector<12x1xf32>
      %148 = vector.broadcast %147 : vector<12x1xf32> to vector<12x256xf32>
      %149 = arith.mulf %127, %148 : vector<12x256xf32>
      %150 = arith.index_cast %arg9 : i32 to index
      %c0_100 = arith.constant 0 : index
      %c0_101 = arith.constant 0 : index
      %151 = vector.load %arg5[%150, %c0_100, %c0_101] : memref<2x12x256xf32, #tpu.memory_space<vmem>>, vector<1x12x256xf32>
      %152 = vector.shape_cast %151 : vector<1x12x256xf32> to vector<12x256xf32>
      %153 = vector.shape_cast %149 : vector<12x256xf32> to vector<1x12x256xf32>
      tpu.vector_store %arg5[%150, %c0_100, %c0_101], %153 {strides = array<i32>} : memref<2x12x256xf32, #tpu.memory_space<vmem>>, vector<1x12x256xf32>,
    }
    %c2_i32_22 = arith.constant 2 : i32
    return
  }
  func.func @transform_0(%arg0: i32) -> (i32, i32, i32) {
    %c0_i32 = arith.constant 0 : i32
    %c0_i32_0 = arith.constant 0 : i32
    %c0_i32_1 = arith.constant 0 : i32
    return %arg0, %c0_i32, %c0_i32_0 : i32, i32, i32
  }
  func.func @transform_1(%arg0: i32) -> (i32, i32) {
    %c0_i32 = arith.constant 0 : i32
    %c0_i32_0 = arith.constant 0 : i32
    %c0_i32_1 = arith.constant 0 : i32
    return %c0_i32, %c0_i32_0 : i32, i32
  }
  func.func @transform_2(%arg0: i32) -> (i32, i32) {
    %c0_i32 = arith.constant 0 : i32
    %c0_i32_0 = arith.constant 0 : i32
    %c0_i32_1 = arith.constant 0 : i32
    return %c0_i32, %c0_i32_0 : i32, i32
  }
  func.func @transform_3(%arg0: i32) -> (i32, i32) {
    %c0_i32 = arith.constant 0 : i32
    %c0_i32_0 = arith.constant 0 : i32
    %c0_i32_1 = arith.constant 0 : i32
    return %c0_i32, %c0_i32_0 : i32, i32
  }
  func.func @transform_4(%arg0: i32) -> (i32, i32, i32) {
    %c0_i32 = arith.constant 0 : i32
    %c0_i32_0 = arith.constant 0 : i32
    %c0_i32_1 = arith.constant 0 : i32
    return %arg0, %c0_i32, %c0_i32_0 : i32, i32, i32
  }
}

</mosaic_0001>

<llo_original>
// kernel: tpu_custom_call.1
$region0: #{tpu_custom_call.1}
  #allocation0 [shape = 'u32[]', space=smem, size = 0x4, offset = 0x4, fixed_abs, tag = 'smem constant byte address 0x4 - core index']
  #allocation1 [shape = 'u32[72,128]{1,0:T(1,128)}', space=vmem, size = 0x9000, scoped, tag = 'internal scratch']
  #allocation2 [shape = 'f32[12,512]{1,0:T(8,128)}', space=vmem, size = 0x8000, scoped, tag = 'scratch operand']
  #allocation3 [shape = 'f32[4,512]{1,0:T(4,128)}', space=vmem, size = 0x2000, scoped, tag = 'scratch operand']
  #allocation4 [shape = 'f32[108,256]{1,0:T(8,128)}', space=vmem, size = 0x1c000, scoped, tag = 'scratch operand']
  %s0 = inlined_call_operand.vmem [shape: f32[2,12,256], index: 0, kind: input, shape index: {}]
  %s1 = inlined_call_operand.vmem [shape: f32[4,108], index: 1, kind: input, shape index: {}]
  %s2 = inlined_call_operand.vmem [shape: f32[12,36], index: 2, kind: input, shape index: {}]
  %s3 = inlined_call_operand.vmem [shape: f32[13,5], index: 3, kind: input, shape index: {}]
  %s4 = inlined_call_operand.vmem [shape: f32[2,12,256], index: 4, kind: output, shape index: {}]
  %s5 = sld [smem:[#allocation0]]
  $region33: #{tpu_custom_call.1} parent=0
    _
  %s7 = ssub.s32 1, %s5
  %s8 = scalar_select 0, %s7, %s5
  // Predicated region
  $region2: #{tpu_custom_call.1} parent=0 // pred_check
    _
  $region3: #{tpu_custom_call.1} parent=0 // pred_check_branch
    %10 = sbr.rel (0) target = $region5
  $region4: #{tpu_custom_call.1} parent=0 // pred_region
    _
  $region5: #{tpu_custom_call.1} parent=0 // pred_fallthru
    _
  // Predicated region
  $region6: #{tpu_custom_call.1} parent=0 // pred_check
    _
  $region7: #{tpu_custom_call.1} parent=0 // pred_check_branch
    %12 = sbr.rel (0) target = $region9
  $region8: #{tpu_custom_call.1} parent=0 // pred_region
    _
  $region9: #{tpu_custom_call.1} parent=0 // pred_fallthru
    _
  // Predicated region
  $region10: #{tpu_custom_call.1} parent=0 // pred_check
    _
  $region11: #{tpu_custom_call.1} parent=0 // pred_check_branch
    %14 = sbr.rel (0) target = $region13
  $region12: #{tpu_custom_call.1} parent=0 // pred_region
    _
  $region13: #{tpu_custom_call.1} parent=0 // pred_fallthru
    _
  // Predicated region
  $region14: #{tpu_custom_call.1} parent=0 // pred_check
    _
  $region15: #{tpu_custom_call.1} parent=0 // pred_check_branch
    %16 = sbr.rel (0) target = $region17
  $region16: #{tpu_custom_call.1} parent=0 // pred_region
    _
  $region17: #{tpu_custom_call.1} parent=0 // pred_fallthru
    _
  %v17 = vlaneseq
  %v18 = vand.u32 %v17, 127
  %v19 = vadd.s32 %v18, 128
  %vm20 = vcmp.lt.s32.totalorder %v18, 0
  %v21 = vsub.s32 0, %v18
  %v22 = vsel %vm20, %v21, %v18
  %v23 = vshrl.u32 %v22, 4
  %v24 = vand.u32 %v22, 15
  %v25 = vsub.s32 0, %v24
  %v26 = vsel %vm20, %v25, %v24
  %vm27 = vcmp.lt.s32.totalorder %v19, 0
  %v28 = vsub.s32 0, %v19
  %v29 = vsel %vm27, %v28, %v19
  %v30 = vshrl.u32 %v29, 4
  %v31 = vand.u32 %v29, 15
  %v32 = vsub.s32 0, %v31
  %v33 = vsel %vm27, %v32, %v31
  %vm34 = vcmp.ne.s32.totalorder %v26, 0
  %vm35 = vcmp.ne.s32.totalorder %v33, 0
  %vm36 = vcmp.lt.s32.totalorder %v26, 0
  %vm37 = vcmp.lt.s32.totalorder %v33, 0
  %vm38 = vmand %vm36, %vm34
  %vm39 = vmand %vm37, %vm35
  %v40 = vadd.s32 %v26, 16
  %v41 = vadd.s32 %v33, 16
  %v42 = vsel %vm38, %v40, %v26
  %v43 = vsel %vm39, %v41, %v33
  %vm44 = vcmp.ne.s32.totalorder %v42, 0
  %vm45 = vcmp.ne.s32.totalorder %v43, 0
  %v46 = vsel %vm44, 1, 0
  %v47 = vsel %vm45, 1, 0
  %v48 = vcvt.s32.f32 %v46
  %v49 = vcvt.s32.f32 %v47
  %vm50 = vcmp.ne.s32.totalorder %v42, 15
  %vm51 = vcmp.ne.s32.totalorder %v43, 15
  %v52 = vsel %vm50, 1, 0
  %v53 = vsel %vm51, 1, 0
  %v54 = vcvt.s32.f32 %v52
  %v55 = vcvt.s32.f32 %v53
  %56 = vst [vmem:[#allocation2] sm:$0xff] 0.0
  %57 = vst [vmem:[#allocation2 + $0x20] sm:$0xf] 0.0
  %58 = vst [vmem:[#allocation2 + $0x18] sm:$0xff] 0.0
  %59 = vst [vmem:[#allocation2 + $0x38] sm:$0xf] 0.0
  %60 = vst [vmem:[#allocation3] sm:$0xf] 0.0
  %61 = vst [vmem:[#allocation3 + $0xc] sm:$0xf] 0.0
  %v62 = vld [vmem:[%s3] sm:$0xff]
  %v63 = vld [vmem:[%s3 + $0x8] sm:$0xf]
  %v64 = vld [vmem:[%s3] sm:$0xf]
  %v65 = vld [vmem:[%s3 + $0xc] sm:$0x1]
  loop: start=0, step=1, limit=2
  $region18: #{tpu_custom_call.1} parent=0 // loop_pre_header
    _
  $region19: #{tpu_custom_call.1} parent=0 // loop_header
    %s67 = sphi 0, %s71
    %p68 = scmp.ge.s32.totalorder %s67, 2
  $region20: #{tpu_custom_call.1} parent=0 // loop_header_branch
    %70 = sbr.rel (%p68) target = $region24
  $region21: #{tpu_custom_call.1} parent=0 // loop_body
    %s72 = smul.u32 %s67, 4
    %s73 = smul.addr %s72, 8
    %s74 = scalar_lea.vmem %s0, %s73
    %v75 = vld [vmem:[%s74] sm:$0xff]
    %v76 = vld [vmem:[%s74 + $0x8] sm:$0xff]
    %v77 = vld [vmem:[%s74 + $0x10] sm:$0xf]
    %v78 = vld [vmem:[%s74 + $0x18] sm:$0xf]
    %79 = vst [vmem:[#allocation2 + $0x8] sm:$0xff] %v75
    %80 = vst [vmem:[#allocation2 + $0x10] sm:$0xff] %v76
    %81 = vst [vmem:[#allocation2 + $0x28] sm:$0xf] %v77
    %82 = vst [vmem:[#allocation2 + $0x30] sm:$0xf] %v78
    %v83 = vld [vmem:[#allocation2] sm:$0xff]
    %v84 = vld [vmem:[#allocation2 + $0x8] sm:$0xff]
    %v85 = vld [vmem:[#allocation2 + $0x10] sm:$0xff]
    %v86 = vld [vmem:[#allocation2 + $0x20] sm:$0xf]
    %v87 = vld [vmem:[#allocation2 + $0x28] sm:$0xf]
    %v88 = vld [vmem:[#allocation2 + $0x30] sm:$0xf]
    %91 = vrot.lane.b32.xlu0 %v48, 111
    %v92 = vpop.permute.xlu0 %91
    %93 = vrot.lane.b32.xlu0 %v49, 111
    %v94 = vpop.permute.xlu0 %93
    %vm95 = vcmask 908288
    %v96 = vsel %vm95, %v92, %v94
    %v100 = vmul.f32 %v83, %v92
    %v101 = vmul.f32 %v84, %v96
    %v102 = vmul.f32 %v85, %v94
    %v103 = vmul.f32 %v86, %v92
    %v104 = vmul.f32 %v87, %v96
    %v105 = vmul.f32 %v88, %v94
    %112 = vrot.lane.b32.xlu0 %v100, 17
    %v113 = vpop.permute.xlu0 %112
    %114 = vrot.lane.b32.xlu0 %v101, 17
    %v115 = vpop.permute.xlu0 %114
    %116 = vrot.lane.b32.xlu0 %v102, 17
    %v117 = vpop.permute.xlu0 %116
    %118 = vrot.lane.b32.xlu0 %v103, 17
    %v119 = vpop.permute.xlu0 %118
    %120 = vrot.lane.b32.xlu0 %v104, 17
    %v121 = vpop.permute.xlu0 %120
    %122 = vrot.lane.b32.xlu0 %v105, 17
    %v123 = vpop.permute.xlu0 %122
    %vm124 = vcmask 138240
    %v125 = vsel %vm124, %v113, %v115
    %v126 = vsel %vm124, %v115, %v117
    %v127 = vsel %vm124, %v119, %v121
    %v128 = vsel %vm124, %v121, %v123
    %133 = vst [vmem:[#allocation4] sm:$0xff] %v125
    %134 = vst [vmem:[#allocation4 + $0x8] sm:$0xff] %v126
    %135 = vst [vmem:[#allocation4 + $0x10] sm:$0xf] %v127
    %136 = vst [vmem:[#allocation4 + $0x18] sm:$0xf] %v128
    %v137 = vld [vmem:[#allocation2] sm:$0xff]
    %v138 = vld [vmem:[#allocation2 + $0x8] sm:$0xff]
    %v139 = vld [vmem:[#allocation2 + $0x10] sm:$0xff]
    %v140 = vld [vmem:[#allocation2 + $0x20] sm:$0xf]
    %v141 = vld [vmem:[#allocation2 + $0x28] sm:$0xf]
    %v142 = vld [vmem:[#allocation2 + $0x30] sm:$0xf]
    %vm149 = vcmask 1043456
    %v150 = vrot.slane %v137, 4
    %v151 = vrot.slane %v138, 4
    %v152 = vrot.slane %v139, 4
    %v153 = vrot.slane %v140, 4
    %v154 = vsel %vm149, %v150, %v153
    %v155 = vrot.slane %v141, 4
    %v156 = vsel %vm149, %v151, %v155
    %v157 = vrot.slane %v142, 4
    %v158 = vsel %vm149, %v152, %v157
    %159 = vrot.lane.b32.xlu0 %v150, 16
    %v160 = vpop.permute.xlu0 %159
    %161 = vrot.lane.b32.xlu0 %v151, 16
    %v162 = vpop.permute.xlu0 %161
    %163 = vrot.lane.b32.xlu0 %v152, 16
    %v164 = vpop.permute.xlu0 %163
    %165 = vrot.lane.b32.xlu0 %v154, 16
    %v166 = vpop.permute.xlu0 %165
    %167 = vrot.lane.b32.xlu0 %v156, 16
    %v168 = vpop.permute.xlu0 %167
    %169 = vrot.lane.b32.xlu0 %v158, 16
    %v170 = vpop.permute.xlu0 %169
    %vm171 = vcmask 130048
    %v172 = vsel %vm171, %v160, %v162
    %v173 = vsel %vm171, %v162, %v164
    %v174 = vsel %vm171, %v166, %v168
    %v175 = vsel %vm171, %v168, %v170
    %180 = vst [vmem:[#allocation4 + $0x10] sm:$0xf0] %v172
    %181 = vst [vmem:[#allocation4 + $0x18] sm:$0xf0] %v173
    %182 = vst [vmem:[#allocation4 + $0x20] sm:$0xff] %v174
    %183 = vst [vmem:[#allocation4 + $0x28] sm:$0xff] %v175
    %v184 = vld [vmem:[#allocation2] sm:$0xff]
    %v185 = vld [vmem:[#allocation2 + $0x8] sm:$0xff]
    %v186 = vld [vmem:[#allocation2 + $0x10] sm:$0xff]
    %v187 = vld [vmem:[#allocation2 + $0x20] sm:$0xf]
    %v188 = vld [vmem:[#allocation2 + $0x28] sm:$0xf]
    %v189 = vld [vmem:[#allocation2 + $0x30] sm:$0xf]
    %192 = vrot.lane.b32.xlu0 %v54, 113
    %v193 = vpop.permute.xlu0 %192
    %194 = vrot.lane.b32.xlu0 %v55, 113
    %v195 = vpop.permute.xlu0 %194
    %vm196 = vcmask 924672
    %v197 = vsel %vm196, %v193, %v195
    %v201 = vmul.f32 %v184, %v193
    %v202 = vmul.f32 %v185, %v197
    %v203 = vmul.f32 %v186, %v195
    %v204 = vmul.f32 %v187, %v193
    %v205 = vmul.f32 %v188, %v197
    %v206 = vmul.f32 %v189, %v195
    %213 = vrot.lane.b32.xlu0 %v201, 15
    %v214 = vpop.permute.xlu0 %213
    %215 = vrot.lane.b32.xlu0 %v202, 15
    %v216 = vpop.permute.xlu0 %215
    %217 = vrot.lane.b32.xlu0 %v203, 15
    %v218 = vpop.permute.xlu0 %217
    %219 = vrot.lane.b32.xlu0 %v204, 15
    %v220 = vpop.permute.xlu0 %219
    %221 = vrot.lane.b32.xlu0 %v205, 15
    %v222 = vpop.permute.xlu0 %221
    %223 = vrot.lane.b32.xlu0 %v206, 15
    %v224 = vpop.permute.xlu0 %223
    %vm225 = vcmask 121856
    %v226 = vsel %vm225, %v214, %v216
    %v227 = vsel %vm225, %v216, %v218
    %v228 = vsel %vm225, %v220, %v222
    %v229 = vsel %vm225, %v222, %v224
    %234 = vst [vmem:[#allocation4 + $0x30] sm:$0xff] %v226
    %235 = vst [vmem:[#allocation4 + $0x38] sm:$0xff] %v227
    %236 = vst [vmem:[#allocation4 + $0x40] sm:$0xf] %v228
    %237 = vst [vmem:[#allocation4 + $0x48] sm:$0xf] %v229
    %v238 = vld [vmem:[#allocation2] sm:$0xff]
    %v239 = vld [vmem:[#allocation2 + $0x8] sm:$0xff]
    %v240 = vld [vmem:[#allocation2 + $0x10] sm:$0xff]
    %v241 = vld [vmem:[#allocation2 + $0x20] sm:$0xf]
    %v242 = vld [vmem:[#allocation2 + $0x28] sm:$0xf]
    %v243 = vld [vmem:[#allocation2 + $0x30] sm:$0xf]
    %244 = vrot.lane.b32.xlu0 %v48, 127
    %v245 = vpop.permute.xlu0 %244
    %246 = vrot.lane.b32.xlu0 %v49, 127
    %v247 = vpop.permute.xlu0 %246
    %vm248 = vcmask 1039360
    %v249 = vsel %vm248, %v245, %v247
    %v253 = vmul.f32 %v238, %v245
    %v254 = vmul.f32 %v239, %v249
    %v255 = vmul.f32 %v240, %v247
    %v256 = vmul.f32 %v241, %v245
    %v257 = vmul.f32 %v242, %v249
    %v258 = vmul.f32 %v243, %v247
    %v265 = vrot.slane %v253, 4
    %v266 = vrot.slane %v254, 4
    %v267 = vrot.slane %v255, 4
    %v268 = vrot.slane %v256, 4
    %v269 = vsel %vm149, %v265, %v268
    %v270 = vrot.slane %v257, 4
    %v271 = vsel %vm149, %v266, %v270
    %v272 = vrot.slane %v258, 4
    %v273 = vsel %vm149, %v267, %v272
    %274 = vrot.lane.b32.xlu0 %v265, 1
    %v275 = vpop.permute.xlu0 %274
    %276 = vrot.lane.b32.xlu0 %v266, 1
    %v277 = vpop.permute.xlu0 %276
    %278 = vrot.lane.b32.xlu0 %v267, 1
    %v279 = vpop.permute.xlu0 %278
    %280 = vrot.lane.b32.xlu0 %v269, 1
    %v281 = vpop.permute.xlu0 %280
    %282 = vrot.lane.b32.xlu0 %v271, 1
    %v283 = vpop.permute.xlu0 %282
    %284 = vrot.lane.b32.xlu0 %v273, 1
    %v285 = vpop.permute.xlu0 %284
    %vm286 = vcmask 7168
    %v287 = vsel %vm286, %v275, %v277
    %v288 = vsel %vm286, %v277, %v279
    %v289 = vsel %vm286, %v281, %v283
    %v290 = vsel %vm286, %v283, %v285
    %295 = vst [vmem:[#allocation4 + $0x40] sm:$0xf0] %v287
    %296 = vst [vmem:[#allocation4 + $0x48] sm:$0xf0] %v288
    %297 = vst [vmem:[#allocation4 + $0x50] sm:$0xff] %v289
    %298 = vst [vmem:[#allocation4 + $0x58] sm:$0xff] %v290
    %v299 = vld [vmem:[#allocation2 + $0x8] sm:$0xff]
    %v300 = vld [vmem:[#allocation2 + $0x10] sm:$0xff]
    %v301 = vld [vmem:[#allocation2 + $0x28] sm:$0xf]
    %v302 = vld [vmem:[#allocation2 + $0x30] sm:$0xf]
    %303 = vst [vmem:[#allocation4 + $0x60] sm:$0xff] %v299
    %304 = vst [vmem:[#allocation4 + $0x68] sm:$0xff] %v300
    %305 = vst [vmem:[#allocation4 + $0x70] sm:$0xf] %v301
    %306 = vst [vmem:[#allocation4 + $0x78] sm:$0xf] %v302
    %v307 = vld [vmem:[#allocation2 + $0x8] sm:$0xff]
    %v308 = vld [vmem:[#allocation2 + $0x10] sm:$0xff]
    %v309 = vld [vmem:[#allocation2 + $0x18] sm:$0xff]
    %v310 = vld [vmem:[#allocation2 + $0x28] sm:$0xf]
    %v311 = vld [vmem:[#allocation2 + $0x30] sm:$0xf]
    %v312 = vld [vmem:[#allocation2 + $0x38] sm:$0xf]
    %313 = vrot.lane.b32.xlu0 %v54, 1
    %v314 = vpop.permute.xlu0 %313
    %315 = vrot.lane.b32.xlu0 %v55, 1
    %v316 = vpop.permute.xlu0 %315
    %v317 = vsel %vm286, %v314, %v316
    %v321 = vmul.f32 %v307, %v314
    %v322 = vmul.f32 %v308, %v317
    %v323 = vmul.f32 %v309, %v316
    %v324 = vmul.f32 %v310, %v314
    %v325 = vmul.f32 %v311, %v317
    %v326 = vmul.f32 %v312, %v316
    %v333 = vrot.slane %v321, 4
    %v334 = vrot.slane %v322, 4
    %v335 = vrot.slane %v323, 4
    %v336 = vrot.slane %v324, 4
    %v337 = vsel %vm149, %v333, %v336
    %v338 = vrot.slane %v325, 4
    %v339 = vsel %vm149, %v334, %v338
    %v340 = vrot.slane %v326, 4
    %v341 = vsel %vm149, %v335, %v340
    %342 = vrot.lane.b32.xlu0 %v333, 127
    %v343 = vpop.permute.xlu0 %342
    %344 = vrot.lane.b32.xlu0 %v334, 127
    %v345 = vpop.permute.xlu0 %344
    %346 = vrot.lane.b32.xlu0 %v335, 127
    %v347 = vpop.permute.xlu0 %346
    %348 = vrot.lane.b32.xlu0 %v337, 127
    %v349 = vpop.permute.xlu0 %348
    %350 = vrot.lane.b32.xlu0 %v339, 127
    %v351 = vpop.permute.xlu0 %350
    %352 = vrot.lane.b32.xlu0 %v341, 127
    %v353 = vpop.permute.xlu0 %352
    %v354 = vsel %vm248, %v343, %v345
    %v355 = vsel %vm248, %v345, %v347
    %v356 = vsel %vm248, %v349, %v351
    %v357 = vsel %vm248, %v351, %v353
    %362 = vst [vmem:[#allocation4 + $0x70] sm:$0xf0] %v354
    %363 = vst [vmem:[#allocation4 + $0x78] sm:$0xf0] %v355
    %364 = vst [vmem:[#allocation4 + $0x80] sm:$0xff] %v356
    %365 = vst [vmem:[#allocation4 + $0x88] sm:$0xff] %v357
    %v366 = vld [vmem:[#allocation2 + $0x8] sm:$0xff]
    %v367 = vld [vmem:[#allocation2 + $0x10] sm:$0xff]
    %v368 = vld [vmem:[#allocation2 + $0x18] sm:$0xff]
    %v369 = vld [vmem:[#allocation2 + $0x28] sm:$0xf]
    %v370 = vld [vmem:[#allocation2 + $0x30] sm:$0xf]
    %v371 = vld [vmem:[#allocation2 + $0x38] sm:$0xf]
    %372 = vrot.lane.b32.xlu0 %v48, 15
    %v373 = vpop.permute.xlu0 %372
    %374 = vrot.lane.b32.xlu0 %v49, 15
    %v375 = vpop.permute.xlu0 %374
    %v376 = vsel %vm225, %v373, %v375
    %v380 = vmul.f32 %v366, %v373
    %v381 = vmul.f32 %v367, %v376
    %v382 = vmul.f32 %v368, %v375
    %v383 = vmul.f32 %v369, %v373
    %v384 = vmul.f32 %v370, %v376
    %v385 = vmul.f32 %v371, %v375
    %392 = vrot.lane.b32.xlu0 %v380, 113
    %v393 = vpop.permute.xlu0 %392
    %394 = vrot.lane.b32.xlu0 %v381, 113
    %v395 = vpop.permute.xlu0 %394
    %396 = vrot.lane.b32.xlu0 %v382, 113
    %v397 = vpop.permute.xlu0 %396
    %398 = vrot.lane.b32.xlu0 %v383, 113
    %v399 = vpop.permute.xlu0 %398
    %400 = vrot.lane.b32.xlu0 %v384, 113
    %v401 = vpop.permute.xlu0 %400
    %402 = vrot.lane.b32.xlu0 %v385, 113
    %v403 = vpop.permute.xlu0 %402
    %v404 = vsel %vm196, %v393, %v395
    %v405 = vsel %vm196, %v395, %v397
    %v406 = vsel %vm196, %v399, %v401
    %v407 = vsel %vm196, %v401, %v403
    %412 = vst [vmem:[#allocation4 + $0x90] sm:$0xff] %v404
    %413 = vst [vmem:[#allocation4 + $0x98] sm:$0xff] %v405
    %414 = vst [vmem:[#allocation4 + $0xa0] sm:$0xf] %v406
    %415 = vst [vmem:[#allocation4 + $0xa8] sm:$0xf] %v407
    %v416 = vld [vmem:[#allocation2 + $0x8] sm:$0xff]
    %v417 = vld [vmem:[#allocation2 + $0x10] sm:$0xff]
    %v418 = vld [vmem:[#allocation2 + $0x18] sm:$0xff]
    %v419 = vld [vmem:[#allocation2 + $0x28] sm:$0xf]
    %v420 = vld [vmem:[#allocation2 + $0x30] sm:$0xf]
    %v421 = vld [vmem:[#allocation2 + $0x38] sm:$0xf]
    %v428 = vrot.slane %v416, 4
    %v429 = vrot.slane %v417, 4
    %v430 = vrot.slane %v418, 4
    %v431 = vrot.slane %v419, 4
    %v432 = vsel %vm149, %v428, %v431
    %v433 = vrot.slane %v420, 4
    %v434 = vsel %vm149, %v429, %v433
    %v435 = vrot.slane %v421, 4
    %v436 = vsel %vm149, %v430, %v435
    %437 = vrot.lane.b32.xlu0 %v428, 112
    %v438 = vpop.permute.xlu0 %437
    %439 = vrot.lane.b32.xlu0 %v429, 112
    %v440 = vpop.permute.xlu0 %439
    %441 = vrot.lane.b32.xlu0 %v430, 112
    %v442 = vpop.permute.xlu0 %441
    %443 = vrot.lane.b32.xlu0 %v432, 112
    %v444 = vpop.permute.xlu0 %443
    %445 = vrot.lane.b32.xlu0 %v434, 112
    %v446 = vpop.permute.xlu0 %445
    %447 = vrot.lane.b32.xlu0 %v436, 112
    %v448 = vpop.permute.xlu0 %447
    %vm449 = vcmask 916480
    %v450 = vsel %vm449, %v438, %v440
    %v451 = vsel %vm449, %v440, %v442
    %v452 = vsel %vm449, %v444, %v446
    %v453 = vsel %vm449, %v446, %v448
    %458 = vst [vmem:[#allocation4 + $0xa0] sm:$0xf0] %v450
    %459 = vst [vmem:[#allocation4 + $0xa8] sm:$0xf0] %v451
    %460 = vst [vmem:[#allocation4 + $0xb0] sm:$0xff] %v452
    %461 = vst [vmem:[#allocation4 + $0xb8] sm:$0xff] %v453
    %v462 = vld [vmem:[#allocation2 + $0x8] sm:$0xff]
    %v463 = vld [vmem:[#allocation2 + $0x10] sm:$0xff]
    %v464 = vld [vmem:[#allocation2 + $0x18] sm:$0xff]
    %v465 = vld [vmem:[#allocation2 + $0x28] sm:$0xf]
    %v466 = vld [vmem:[#allocation2 + $0x30] sm:$0xf]
    %v467 = vld [vmem:[#allocation2 + $0x38] sm:$0xf]
    %468 = vrot.lane.b32.xlu0 %v54, 17
    %v469 = vpop.permute.xlu0 %468
    %470 = vrot.lane.b32.xlu0 %v55, 17
    %v471 = vpop.permute.xlu0 %470
    %v472 = vsel %vm124, %v469, %v471
    %v476 = vmul.f32 %v462, %v469
    %v477 = vmul.f32 %v463, %v472
    %v478 = vmul.f32 %v464, %v471
    %v479 = vmul.f32 %v465, %v469
    %v480 = vmul.f32 %v466, %v472
    %v481 = vmul.f32 %v467, %v471
    %488 = vrot.lane.b32.xlu0 %v476, 111
    %v489 = vpop.permute.xlu0 %488
    %490 = vrot.lane.b32.xlu0 %v477, 111
    %v491 = vpop.permute.xlu0 %490
    %492 = vrot.lane.b32.xlu0 %v478, 111
    %v493 = vpop.permute.xlu0 %492
    %494 = vrot.lane.b32.xlu0 %v479, 111
    %v495 = vpop.permute.xlu0 %494
    %496 = vrot.lane.b32.xlu0 %v480, 111
    %v497 = vpop.permute.xlu0 %496
    %498 = vrot.lane.b32.xlu0 %v481, 111
    %v499 = vpop.permute.xlu0 %498
    %v500 = vsel %vm95, %v489, %v491
    %v501 = vsel %vm95, %v491, %v493
    %v502 = vsel %vm95, %v495, %v497
    %v503 = vsel %vm95, %v497, %v499
    %508 = vst [vmem:[#allocation4 + $0xc0] sm:$0xff] %v500
    %509 = vst [vmem:[#allocation4 + $0xc8] sm:$0xff] %v501
    %510 = vst [vmem:[#allocation4 + $0xd0] sm:$0xf] %v502
    %511 = vst [vmem:[#allocation4 + $0xd8] sm:$0xf] %v503
    %v512 = vld [vmem:[%s1] sm:$0xf]
    %v513 = vld [vmem:[#allocation4] sm:$0xff]
    %v514 = vld [vmem:[#allocation4 + $0x8] sm:$0xff]
    %v515 = vld [vmem:[#allocation4 + $0x10] sm:$0xff]
    %v516 = vld [vmem:[#allocation4 + $0x18] sm:$0xff]
    %v517 = vld [vmem:[#allocation4 + $0x20] sm:$0xff]
    %v518 = vld [vmem:[#allocation4 + $0x28] sm:$0xff]
    %v519 = vld [vmem:[#allocation4 + $0x30] sm:$0xff]
    %v520 = vld [vmem:[#allocation4 + $0x38] sm:$0xff]
    %v521 = vld [vmem:[#allocation4 + $0x40] sm:$0xff]
    %v522 = vld [vmem:[#allocation4 + $0x48] sm:$0xff]
    %v523 = vld [vmem:[#allocation4 + $0x50] sm:$0xff]
    %v524 = vld [vmem:[#allocation4 + $0x58] sm:$0xff]
    %v525 = vld [vmem:[#allocation4 + $0x60] sm:$0xff]
    %v526 = vld [vmem:[#allocation4 + $0x68] sm:$0xff]
    %v527 = vld [vmem:[#allocation4 + $0x70] sm:$0xff]
    %v528 = vld [vmem:[#allocation4 + $0x78] sm:$0xff]
    %v529 = vld [vmem:[#allocation4 + $0x80] sm:$0xff]
    %v530 = vld [vmem:[#allocation4 + $0x88] sm:$0xff]
    %v531 = vld [vmem:[#allocation4 + $0x90] sm:$0xff]
    %v532 = vld [vmem:[#allocation4 + $0x98] sm:$0xff]
    %v533 = vld [vmem:[#allocation4 + $0xa0] sm:$0xff]
    %v534 = vld [vmem:[#allocation4 + $0xa8] sm:$0xff]
    %v535 = vld [vmem:[#allocation4 + $0xb0] sm:$0xff]
    %v536 = vld [vmem:[#allocation4 + $0xb8] sm:$0xff]
    %v537 = vld [vmem:[#allocation4 + $0xc0] sm:$0xff]
    %v538 = vld [vmem:[#allocation4 + $0xc8] sm:$0xff]
    %v539 = vld [vmem:[#allocation4 + $0xd0] sm:$0xf]
    %v540 = vld [vmem:[#allocation4 + $0xd8] sm:$0xf]
    %542 = vset.pattern.permute.xlu0 4
    %543 = vperm.xlu0 %542, %v64
    %v544 = vpop.permute.xlu0 %543
    %vm546 = vcmask 883712
    %v548 = vsel %vm546, %v512, 0
    %v551 = vsel %vm149, %v539, 0
    %v554 = vsel %vm149, %v540, 0
    %556 = vmatpush.msra.mxu0 0.0
    %557 = vmatpush.msra.mxu0 0.0
    %558 = vmatpush.msra.mxu0 %v551
    %559 = vmatpush.msra.mxu0 %v537
    %560 = vmatpush.msra.mxu0 %v535
    %561 = vmatpush.msra.mxu0 %v533
    %562 = vmatpush.msra.mxu0 %v531
    %563 = vmatpush.msra.mxu0 %v529
    %564 = vmatpush.msra.mxu0 %v527
    %565 = vmatpush.msra.mxu0 %v525
    %566 = vmatpush.msra.mxu0 %v523
    %567 = vmatpush.msra.mxu0 %v521
    %568 = vmatpush.msra.mxu0 %v519
    %569 = vmatpush.msra.mxu0 %v517
    %570 = vmatpush.msra.mxu0 %v515
    %571 = vmatpush.msra.mxu0 %v513
    %572 = vmatmul.f32.gmra.mxu0 %v548
    %v573 = vpop.f32.mrf.mxu0
    %v574 = vadd.f32 %v544, %v573
    %575 = vdwg.mxu0
    %576 = vmatpush.msra.mxu0 0.0
    %577 = vmatpush.msra.mxu0 0.0
    %578 = vmatpush.msra.mxu0 %v554
    %579 = vmatpush.msra.mxu0 %v538
    %580 = vmatpush.msra.mxu0 %v536
    %581 = vmatpush.msra.mxu0 %v534
    %582 = vmatpush.msra.mxu0 %v532
    %583 = vmatpush.msra.mxu0 %v530
    %584 = vmatpush.msra.mxu0 %v528
    %585 = vmatpush.msra.mxu0 %v526
    %586 = vmatpush.msra.mxu0 %v524
    %587 = vmatpush.msra.mxu0 %v522
    %588 = vmatpush.msra.mxu0 %v520
    %589 = vmatpush.msra.mxu0 %v518
    %590 = vmatpush.msra.mxu0 %v516
    %591 = vmatpush.msra.mxu0 %v514
    %592 = vmatmul.f32.gmra.mxu0 %v548
    %v593 = vpop.f32.mrf.mxu0
    %v594 = vadd.f32 %v544, %v593
    %595 = vdwg.mxu0
    %v596 = vmul.f32 %v574, 0.5
    %v597 = vmul.f32 %v594, 0.5
    %v598 = vmul.f32 %v574, %v574
    %v599 = vmul.f32 %v594, %v594
    %v600 = vmul.f32 %v598, %v574
    %v601 = vmul.f32 %v599, %v594
    %v602 = vmul.f32 %v600, 0.044715
    %v603 = vmul.f32 %v601, 0.044715
    %v604 = vadd.f32 %v574, %v602
    %v605 = vadd.f32 %v594, %v603
    %v606 = vmul.f32 %v604, 0.7978846
    %v607 = vmul.f32 %v605, 0.7978846
    %v608 = vtanh.pop %v606
    %v609 = vtanh.pop %v607
    %v610 = vadd.f32 %v608, 1.0
    %v611 = vadd.f32 %v609, 1.0
    %v612 = vmul.f32 %v596, %v610
    %v613 = vmul.f32 %v597, %v611
    %v616 = vrot.slane %v613, 4
    %v617 = vsel %vm149, %v612, %v616
    %619 = vst [vmem:[#allocation3 + $0x4] sm:$0xff] %v617
    %v620 = vld [vmem:[#allocation3] sm:$0xff]
    %v621 = vld [vmem:[#allocation3 + $0x8] sm:$0xf]
    %v622 = vrot.slane %v49, 4
    %v623 = vsel %vm149, %v48, %v622
    %624 = vrot.lane.b32.xlu0 %v623, 111
    %v625 = vpop.permute.xlu0 %624
    %v626 = vrot.slane %v625, 4
    %v627 = vsel %vm95, %v626, %v625
    %v630 = vmul.f32 %v620, %v627
    %v631 = vmul.f32 %v621, %v626
    %634 = vst [vmem:[#allocation1] ss:$2 sm:$0xff] %v630
    %s635 = scalar_lea.vmem [#allocation1], 16
    %636 = vst [vmem:[%s635] ss:$2 sm:$0xff] %v631
    %v637 = vld.sshfl [vmem:[#allocation1] sm:$0xff pattern:$0x75316420]
    %v638 = vld.sshfl [vmem:[#allocation1 + $0x8] sm:$0xff pattern:$0x75316420]
    %v639 = vld.sshfl [vmem:[#allocation1 + $0x10] sm:$0xff pattern:$0x75316420]
    %640 = vrot.lane.b32.xlu0 %v637, 17
    %v641 = vpop.permute.xlu0 %640
    %642 = vrot.lane.b32.xlu0 %v638, 17
    %v643 = vpop.permute.xlu0 %642
    %644 = vrot.lane.b32.xlu0 %v639, 17
    %v645 = vpop.permute.xlu0 %644
    %v646 = vsel %vm124, %v641, %v643
    %v647 = vsel %vm124, %v643, %v645
    %650 = vst [vmem:[#allocation4] sm:$0xf] %v646
    %651 = vst [vmem:[#allocation4 + $0x8] sm:$0xf] %v647
    %v652 = vld [vmem:[#allocation3] sm:$0xff]
    %v653 = vld [vmem:[#allocation3 + $0x8] sm:$0xf]
    %s656 = scalar_lea.vmem [#allocation1], 1
    %657 = vst [vmem:[%s656] ss:$2 sm:$0xff] %v652
    %s658 = scalar_lea.vmem [#allocation1], 17
    %659 = vst [vmem:[%s658] ss:$2 sm:$0xff] %v653
    %v660 = vld.sshfl [vmem:[#allocation1] sm:$0xff pattern:$0x75316420]
    %v661 = vld.sshfl [vmem:[#allocation1 + $0x8] sm:$0xff pattern:$0x75316420]
    %v662 = vld.sshfl [vmem:[#allocation1 + $0x10] sm:$0xff pattern:$0x75316420]
    %663 = vrot.lane.b32.xlu0 %v660, 16
    %v664 = vpop.permute.xlu0 %663
    %665 = vrot.lane.b32.xlu0 %v661, 16
    %v666 = vpop.permute.xlu0 %665
    %667 = vrot.lane.b32.xlu0 %v662, 16
    %v668 = vpop.permute.xlu0 %667
    %v669 = vsel %vm171, %v664, %v666
    %v670 = vsel %vm171, %v666, %v668
    %673 = vst [vmem:[#allocation4] sm:$0xf0] %v669
    %674 = vst [vmem:[#allocation4 + $0x8] sm:$0xf0] %v670
    %v675 = vld [vmem:[#allocation3] sm:$0xff]
    %v676 = vld [vmem:[#allocation3 + $0x8] sm:$0xf]
    %v677 = vrot.slane %v55, 4
    %v678 = vsel %vm149, %v54, %v677
    %679 = vrot.lane.b32.xlu0 %v678, 113
    %v680 = vpop.permute.xlu0 %679
    %v681 = vrot.slane %v680, 4
    %v682 = vsel %vm196, %v681, %v680
    %v685 = vmul.f32 %v675, %v682
    %v686 = vmul.f32 %v676, %v681
    %689 = vst [vmem:[#allocation1] ss:$2 sm:$0xff] %v685
    %s690 = scalar_lea.vmem [#allocation1], 16
    %691 = vst [vmem:[%s690] ss:$2 sm:$0xff] %v686
    %v692 = vld.sshfl [vmem:[#allocation1] sm:$0xff pattern:$0x75316420]
    %v693 = vld.sshfl [vmem:[#allocation1 + $0x8] sm:$0xff pattern:$0x75316420]
    %v694 = vld.sshfl [vmem:[#allocation1 + $0x10] sm:$0xff pattern:$0x75316420]
    %695 = vrot.lane.b32.xlu0 %v692, 15
    %v696 = vpop.permute.xlu0 %695
    %697 = vrot.lane.b32.xlu0 %v693, 15
    %v698 = vpop.permute.xlu0 %697
    %699 = vrot.lane.b32.xlu0 %v694, 15
    %v700 = vpop.permute.xlu0 %699
    %v701 = vsel %vm225, %v696, %v698
    %v702 = vsel %vm225, %v698, %v700
    %705 = vst [vmem:[#allocation4 + $0x10] sm:$0xf] %v701
    %706 = vst [vmem:[#allocation4 + $0x18] sm:$0xf] %v702
    %v707 = vld [vmem:[#allocation3] sm:$0xff]
    %v708 = vld [vmem:[#allocation3 + $0x8] sm:$0xf]
    %709 = vrot.lane.b32.xlu0 %v623, 127
    %v710 = vpop.permute.xlu0 %709
    %v711 = vrot.slane %v710, 4
    %v712 = vsel %vm248, %v711, %v710
    %v715 = vmul.f32 %v707, %v712
    %v716 = vmul.f32 %v708, %v711
    %s719 = scalar_lea.vmem [#allocation1], 1
    %720 = vst [vmem:[%s719] ss:$2 sm:$0xff] %v715
    %s721 = scalar_lea.vmem [#allocation1], 17
    %722 = vst [vmem:[%s721] ss:$2 sm:$0xff] %v716
    %v723 = vld.sshfl [vmem:[#allocation1] sm:$0xff pattern:$0x75316420]
    %v724 = vld.sshfl [vmem:[#allocation1 + $0x8] sm:$0xff pattern:$0x75316420]
    %v725 = vld.sshfl [vmem:[#allocation1 + $0x10] sm:$0xff pattern:$0x75316420]
    %726 = vrot.lane.b32.xlu0 %v723, 1
    %v727 = vpop.permute.xlu0 %726
    %728 = vrot.lane.b32.xlu0 %v724, 1
    %v729 = vpop.permute.xlu0 %728
    %730 = vrot.lane.b32.xlu0 %v725, 1
    %v731 = vpop.permute.xlu0 %730
    %v732 = vsel %vm286, %v727, %v729
    %v733 = vsel %vm286, %v729, %v731
    %736 = vst [vmem:[#allocation4 + $0x10] sm:$0xf0] %v732
    %737 = vst [vmem:[#allocation4 + $0x18] sm:$0xf0] %v733
    %v738 = vld [vmem:[#allocation3 + $0x4] sm:$0xff]
    %740 = vst [vmem:[#allocation1] ss:$2 sm:$0xff] %v738
    %v741 = vld.sshfl [vmem:[#allocation1] sm:$0xff pattern:$0x75316420]
    %v742 = vld.sshfl [vmem:[#allocation1 + $0x8] sm:$0xff pattern:$0x75316420]
    %745 = vst [vmem:[#allocation4 + $0x20] sm:$0xf] %v741
    %746 = vst [vmem:[#allocation4 + $0x28] sm:$0xf] %v742
    %v747 = vld [vmem:[#allocation3 + $0x4] sm:$0xff]
    %v748 = vld [vmem:[#allocation3 + $0xc] sm:$0xf]
    %749 = vrot.lane.b32.xlu0 %v678, 1
    %v750 = vpop.permute.xlu0 %749
    %v751 = vrot.slane %v750, 4
    %v752 = vsel %vm286, %v751, %v750
    %v755 = vmul.f32 %v747, %v752
    %v756 = vmul.f32 %v748, %v751
    %s759 = scalar_lea.vmem [#allocation1], 1
    %760 = vst [vmem:[%s759] ss:$2 sm:$0xff] %v755
    %s761 = scalar_lea.vmem [#allocation1], 17
    %762 = vst [vmem:[%s761] ss:$2 sm:$0xff] %v756
    %v763 = vld.sshfl [vmem:[#allocation1] sm:$0xff pattern:$0x75316420]
    %v764 = vld.sshfl [vmem:[#allocation1 + $0x8] sm:$0xff pattern:$0x75316420]
    %v765 = vld.sshfl [vmem:[#allocation1 + $0x10] sm:$0xff pattern:$0x75316420]
    %766 = vrot.lane.b32.xlu0 %v763, 127
    %v767 = vpop.permute.xlu0 %766
    %768 = vrot.lane.b32.xlu0 %v764, 127
    %v769 = vpop.permute.xlu0 %768
    %770 = vrot.lane.b32.xlu0 %v765, 127
    %v771 = vpop.permute.xlu0 %770
    %v772 = vsel %vm248, %v767, %v769
    %v773 = vsel %vm248, %v769, %v771
    %776 = vst [vmem:[#allocation4 + $0x20] sm:$0xf0] %v772
    %777 = vst [vmem:[#allocation4 + $0x28] sm:$0xf0] %v773
    %v778 = vld [vmem:[#allocation3 + $0x4] sm:$0xff]
    %v779 = vld [vmem:[#allocation3 + $0xc] sm:$0xf]
    %780 = vrot.lane.b32.xlu0 %v623, 15
    %v781 = vpop.permute.xlu0 %780
    %v782 = vrot.slane %v781, 4
    %v783 = vsel %vm225, %v782, %v781
    %v786 = vmul.f32 %v778, %v783
    %v787 = vmul.f32 %v779, %v782
    %790 = vst [vmem:[#allocation1] ss:$2 sm:$0xff] %v786
    %s791 = scalar_lea.vmem [#allocation1], 16
    %792 = vst [vmem:[%s791] ss:$2 sm:$0xff] %v787
    %v793 = vld.sshfl [vmem:[#allocation1] sm:$0xff pattern:$0x75316420]
    %v794 = vld.sshfl [vmem:[#allocation1 + $0x8] sm:$0xff pattern:$0x75316420]
    %v795 = vld.sshfl [vmem:[#allocation1 + $0x10] sm:$0xff pattern:$0x75316420]
    %796 = vrot.lane.b32.xlu0 %v793, 113
    %v797 = vpop.permute.xlu0 %796
    %798 = vrot.lane.b32.xlu0 %v794, 113
    %v799 = vpop.permute.xlu0 %798
    %800 = vrot.lane.b32.xlu0 %v795, 113
    %v801 = vpop.permute.xlu0 %800
    %v802 = vsel %vm196, %v797, %v799
    %v803 = vsel %vm196, %v799, %v801
    %806 = vst [vmem:[#allocation4 + $0x30] sm:$0xf] %v802
    %807 = vst [vmem:[#allocation4 + $0x38] sm:$0xf] %v803
    %v808 = vld [vmem:[#allocation3 + $0x4] sm:$0xff]
    %v809 = vld [vmem:[#allocation3 + $0xc] sm:$0xf]
    %s812 = scalar_lea.vmem [#allocation1], 1
    %813 = vst [vmem:[%s812] ss:$2 sm:$0xff] %v808
    %s814 = scalar_lea.vmem [#allocation1], 17
    %815 = vst [vmem:[%s814] ss:$2 sm:$0xff] %v809
    %v816 = vld.sshfl [vmem:[#allocation1] sm:$0xff pattern:$0x75316420]
    %v817 = vld.sshfl [vmem:[#allocation1 + $0x8] sm:$0xff pattern:$0x75316420]
    %v818 = vld.sshfl [vmem:[#allocation1 + $0x10] sm:$0xff pattern:$0x75316420]
    %819 = vrot.lane.b32.xlu0 %v816, 112
    %v820 = vpop.permute.xlu0 %819
    %821 = vrot.lane.b32.xlu0 %v817, 112
    %v822 = vpop.permute.xlu0 %821
    %823 = vrot.lane.b32.xlu0 %v818, 112
    %v824 = vpop.permute.xlu0 %823
    %v825 = vsel %vm449, %v820, %v822
    %v826 = vsel %vm449, %v822, %v824
    %829 = vst [vmem:[#allocation4 + $0x30] sm:$0xf0] %v825
    %830 = vst [vmem:[#allocation4 + $0x38] sm:$0xf0] %v826
    %v831 = vld [vmem:[#allocation3 + $0x4] sm:$0xff]
    %v832 = vld [vmem:[#allocation3 + $0xc] sm:$0xf]
    %833 = vrot.lane.b32.xlu0 %v678, 17
    %v834 = vpop.permute.xlu0 %833
    %v835 = vrot.slane %v834, 4
    %v836 = vsel %vm124, %v835, %v834
    %v839 = vmul.f32 %v831, %v836
    %v840 = vmul.f32 %v832, %v835
    %843 = vst [vmem:[#allocation1] ss:$2 sm:$0xff] %v839
    %s844 = scalar_lea.vmem [#allocation1], 16
    %845 = vst [vmem:[%s844] ss:$2 sm:$0xff] %v840
    %v846 = vld.sshfl [vmem:[#allocation1] sm:$0xff pattern:$0x75316420]
    %v847 = vld.sshfl [vmem:[#allocation1 + $0x8] sm:$0xff pattern:$0x75316420]
    %v848 = vld.sshfl [vmem:[#allocation1 + $0x10] sm:$0xff pattern:$0x75316420]
    %849 = vrot.lane.b32.xlu0 %v846, 111
    %v850 = vpop.permute.xlu0 %849
    %851 = vrot.lane.b32.xlu0 %v847, 111
    %v852 = vpop.permute.xlu0 %851
    %853 = vrot.lane.b32.xlu0 %v848, 111
    %v854 = vpop.permute.xlu0 %853
    %v855 = vsel %vm95, %v850, %v852
    %v856 = vsel %vm95, %v852, %v854
    %859 = vst [vmem:[#allocation4 + $0x40] sm:$0xf] %v855
    %860 = vst [vmem:[#allocation4 + $0x48] sm:$0xf] %v856
    %v861 = vld [vmem:[%s2] sm:$0xff]
    %v862 = vld [vmem:[%s2 + $0x8] sm:$0xf]
    %v863 = vld [vmem:[#allocation4] sm:$0xff]
    %v864 = vld [vmem:[#allocation4 + $0x8] sm:$0xff]
    %v865 = vld [vmem:[#allocation4 + $0x10] sm:$0xff]
    %v866 = vld [vmem:[#allocation4 + $0x18] sm:$0xff]
    %v867 = vld [vmem:[#allocation4 + $0x20] sm:$0xff]
    %v868 = vld [vmem:[#allocation4 + $0x28] sm:$0xff]
    %v869 = vld [vmem:[#allocation4 + $0x30] sm:$0xff]
    %v870 = vld [vmem:[#allocation4 + $0x38] sm:$0xff]
    %v871 = vld [vmem:[#allocation4 + $0x40] sm:$0xf]
    %v872 = vld [vmem:[#allocation4 + $0x48] sm:$0xf]
    %874 = vset.pattern.permute.xlu0 3
    %875 = vperm.xlu0 %874, %v62
    %v876 = vpop.permute.xlu0 %875
    %879 = vset.pattern.permute.xlu0 3
    %880 = vperm.xlu0 %879, %v63
    %v881 = vpop.permute.xlu0 %880
    %vm883 = vcmask 293888
    %v885 = vsel %vm883, %v861, 0
    %v888 = vsel %vm883, %v862, 0
    %v891 = vsel %vm149, %v871, 0
    %v894 = vsel %vm149, %v872, 0
    %896 = vmatpush.msra.mxu0 0.0
    %897 = vmatpush.msra.mxu0 0.0
    %898 = vmatpush.msra.mxu0 0.0
    %899 = vmatpush.msra.mxu0 0.0
    %900 = vmatpush.msra.mxu0 0.0
    %901 = vmatpush.msra.mxu0 0.0
    %902 = vmatpush.msra.mxu0 0.0
    %903 = vmatpush.msra.mxu0 0.0
    %904 = vmatpush.msra.mxu0 0.0
    %905 = vmatpush.msra.mxu0 0.0
    %906 = vmatpush.msra.mxu0 0.0
    %907 = vmatpush.msra.mxu0 %v891
    %908 = vmatpush.msra.mxu0 %v869
    %909 = vmatpush.msra.mxu0 %v867
    %910 = vmatpush.msra.mxu0 %v865
    %911 = vmatpush.msra.mxu0 %v863
    %912 = vmatmul.f32.gmra.mxu0 %v885
    %v913 = vpop.f32.mrf.mxu0
    %v914 = vadd.f32 %v876, %v913
    %915 = vmatmul.f32.gmra.mxu0 %v888
    %v916 = vpop.f32.mrf.mxu0
    %v917 = vadd.f32 %v881, %v916
    %918 = vdwg.mxu0
    %919 = vmatpush.msra.mxu0 0.0
    %920 = vmatpush.msra.mxu0 0.0
    %921 = vmatpush.msra.mxu0 0.0
    %922 = vmatpush.msra.mxu0 0.0
    %923 = vmatpush.msra.mxu0 0.0
    %924 = vmatpush.msra.mxu0 0.0
    %925 = vmatpush.msra.mxu0 0.0
    %926 = vmatpush.msra.mxu0 0.0
    %927 = vmatpush.msra.mxu0 0.0
    %928 = vmatpush.msra.mxu0 0.0
    %929 = vmatpush.msra.mxu0 0.0
    %930 = vmatpush.msra.mxu0 %v894
    %931 = vmatpush.msra.mxu0 %v870
    %932 = vmatpush.msra.mxu0 %v868
    %933 = vmatpush.msra.mxu0 %v866
    %934 = vmatpush.msra.mxu0 %v864
    %935 = vmatmul.f32.gmra.mxu0 %v885
    %v936 = vpop.f32.mrf.mxu0
    %v937 = vadd.f32 %v876, %v936
    %938 = vmatmul.f32.gmra.mxu0 %v888
    %v939 = vpop.f32.mrf.mxu0
    %v940 = vadd.f32 %v881, %v939
    %941 = vdwg.mxu0
    %v942 = vadd.f32 %v914, %v937
    %943 = vadd.xlane.f32.xlu0 %v942
    %v944 = vpop.xlane.xlu0 %943
    %v945 = vsel %vm149, %v917, 0.0
    %v946 = vsel %vm149, %v940, 0.0
    %v947 = vadd.f32 %v945, %v946
    %948 = vadd.xlane.f32.xlu0 %v947
    %v949 = vpop.xlane.xlu0 %948
    %v950 = vmul.f32 %v944, 0.00390625
    %v951 = vmul.f32 %v949, 0.00390625
    %v952 = vmul.f32 %v62, %v950
    %v953 = vmul.f32 %v63, %v951
    %v954 = vsel %vm286, %v952, 0.0
    %vm955 = vcmask 3072
    %v956 = vsel %vm955, %v953, 0.0
    %v957 = vadd.f32 %v954, %v956
    %v958 = vrot.slane %v957, 4
    %v959 = vadd.f32 %v957, %v958
    %v960 = vrot.slane %v959, 2
    %v961 = vadd.f32 %v959, %v960
    %v962 = vrot.slane %v961, 1
    %v963 = vadd.f32 %v961, %v962
    %v964 = vadd.f32 %v963, %v65
    %v965 = vmax.f32 %v964, 0.0
    %v966 = vperm.slane %v965, 0
    %968 = vrot.lane.b32.xlu0 %v966, 1
    %v969 = vpop.permute.xlu0 %968
    %v971 = vmul.f32 %v62, %v969
    %v972 = vmul.f32 %v63, %v969
    %v973 = vadd.f32 %v971, 0.0
    %v974 = vadd.f32 %v972, 0.0
    %975 = vrot.lane.b32.xlu0 %v62, 127
    %v976 = vpop.permute.xlu0 %975
    %977 = vrot.lane.b32.xlu0 %v63, 127
    %v978 = vpop.permute.xlu0 %977
    %v981 = vadd.f32 %v973, %v976
    %v982 = vadd.f32 %v974, %v978
    %v983 = vxor.u32 %v981, 2147483648
    %v984 = vxor.u32 %v982, 2147483648
    %v985 = vmul.f32 %v983, 1.442695
    %v986 = vpow.pop %v985
    %v987 = vmul.f32 %v984, 1.442695
    %v988 = vpow.pop %v987
    %v989 = vadd.f32 %v986, 1.0
    %v990 = vadd.f32 %v988, 1.0
    %v991 = vrcp.pop %v989
    %v992 = vmul.f32 %v989, %v991
    %v993 = vsub.f32 1.0, %v992
    %v994 = vmul.f32 %v991, %v993
    %v995 = vadd.f32 %v991, %v994
    %vm996 = vweird.f32 %v989
    %vm997 = vweird.f32 %v991
    %vm998 = vmor %vm996, %vm997
    %v999 = vsel %vm998, %v991, %v995
    %v1000 = vand.u32 2147483647, %v989
    %vm1001 = vcmp.eq.f32.partialorder %v1000, 8.507059e+37
    %v1002 = vand.u32 %v989, 2147483648
    %v1003 = vor.u32 1.1754944e-38, %v1002
    %v1004 = vsel %vm1001, %v1003, %v999
    %v1005 = vmul.f32 1.0, %v1004
    %v1006 = vrcp.pop %v990
    %v1007 = vmul.f32 %v990, %v1006
    %v1008 = vsub.f32 1.0, %v1007
    %v1009 = vmul.f32 %v1006, %v1008
    %v1010 = vadd.f32 %v1006, %v1009
    %vm1011 = vweird.f32 %v990
    %vm1012 = vweird.f32 %v1006
    %vm1013 = vmor %vm1011, %vm1012
    %v1014 = vsel %vm1013, %v1006, %v1010
    %v1015 = vand.u32 2147483647, %v990
    %vm1016 = vcmp.eq.f32.partialorder %v1015, 8.507059e+37
    %v1017 = vand.u32 %v990, 2147483648
    %v1018 = vor.u32 1.1754944e-38, %v1017
    %v1019 = vsel %vm1016, %v1018, %v1014
    %v1020 = vmul.f32 1.0, %v1019
    %1022 = vset.pattern.permute.xlu0 1
    %1023 = vperm.xlu0 %1022, %v1005
    %v1024 = vpop.permute.xlu0 %1023
    %1027 = vset.pattern.permute.xlu0 1
    %1028 = vperm.xlu0 %1027, %v1020
    %v1029 = vpop.permute.xlu0 %1028
    %v1031 = vmul.f32 %v914, %v1024
    %v1032 = vmul.f32 %v937, %v1024
    %v1033 = vmul.f32 %v917, %v1029
    %v1034 = vmul.f32 %v940, %v1029
    %s1035 = smul.addr %s72, 8
    %s1036 = scalar_lea.vmem %s4, %s1035
    %1037 = vst [vmem:[%s1036] sm:$0xff] %v1031
    %1038 = vst [vmem:[%s1036 + $0x8] sm:$0xff] %v1032
    %1039 = vst [vmem:[%s1036 + $0x10] sm:$0xf] %v1033
    %1040 = vst [vmem:[%s1036 + $0x18] sm:$0xf] %v1034
  $region22: #{tpu_custom_call.1} parent=0 // loop_footer
    %s71 = sadd.s32 1, %s67
  $region23: #{tpu_custom_call.1} parent=0 // loop_footer_branch
    %66 = sbr.rel target = $region19
  $region24: #{tpu_custom_call.1} parent=0 // loop_exit
    _
  // Predicated region
  $region25: #{tpu_custom_call.1} parent=0 // pred_check
    _
  $region26: #{tpu_custom_call.1} parent=0 // pred_check_branch
    %1042 = sbr.rel (0) target = $region28
  $region27: #{tpu_custom_call.1} parent=0 // pred_region
    _
  $region28: #{tpu_custom_call.1} parent=0 // pred_fallthru
    _
  // Predicated region
  $region29: #{tpu_custom_call.1} parent=0 // pred_check
    _
  $region30: #{tpu_custom_call.1} parent=0 // pred_check_branch
    %1044 = sbr.rel (0) target = $region32
  $region31: #{tpu_custom_call.1} parent=0 // pred_region
    _
  $region32: #{tpu_custom_call.1} parent=0 // pred_fallthru
    _

</llo_original>
